<compile_context>
chip_gen: v7x
topology: tpu7x:2x2x1
jax: 0.10.0
libtpu: 0.0.40
codegen_flags: <defaults>
</compile_context>

<pallas_src>
import numpy as np
import jax
import jax.numpy as jnp
from jax.experimental import pallas as pl
from jax.experimental.pallas import tpu as pltpu

# ---- model_parameters (synthetic, deterministic) ----------------------------
MODEL_PARAMETERS = dict(seed=0, n_user=2, n_channel=4, k=4, m=16)
N_USER = MODEL_PARAMETERS["n_user"]
N_CHANNEL = MODEL_PARAMETERS["n_channel"]
M = MODEL_PARAMETERS["m"]                                   # in_channel (final output dim)
CD = N_USER * N_CHANNEL * 2                                 # compressed_dimension = 16
K2 = 4 if N_CHANNEL > 4 else 2                              # second conv kernel size
FLAT = N_CHANNEL * (CD // 2 - (4 if N_CHANNEL > 4 else 3))  # flatten dim after convs = 20
H2 = CD * 2                                                 # 32

N_LAYERS = 9                                                # lin0, conv1..4, lin5, lin6, dec0, dec1
P = 64                                                      # padded feature width (max real = 60)

_PREC = jax.lax.Precision.HIGHEST                           # used by the reference only


# ---- Pallas kernel: 9 chained GEMMs (+bias, +tanh), uniform padded width ----
def decoder_kernel(x_ref, w_ref, b_ref, o_ref):
    # x_ref: (TB, P) f32, lanes >= CD are zero
    # w_ref: (N_LAYERS, P, P) bf16, zero-padded
    # b_ref: (N_LAYERS, 1, P) f32, zero-padded
    h = x_ref[...]
    for li in range(N_LAYERS):
        w = w_ref[li]                       # (P, P) bf16, static index -> no DMA
        b = b_ref[li]                       # (1, P) f32
        z = jnp.dot(h.astype(jnp.bfloat16), w,
                    preferred_element_type=jnp.float32) + b
        if li < N_LAYERS - 1:               # final decoder Linear has no tanh
            h = jnp.tanh(z)
        else:
            h = z
    o_ref[...] = h[:, :M].astype(o_ref.dtype)


# ---- parameter init (deterministic, torch-default-style uniform) ------------
def init_params(key):
    def linear(k, out_f, in_f):
        k1, k2 = jax.random.split(k)
        bound = 1.0 / np.sqrt(in_f)
        w = jax.random.uniform(k1, (out_f, in_f), jnp.float32, -bound, bound)
        b = jax.random.uniform(k2, (out_f,), jnp.float32, -bound, bound)
        return w, b

    def conv(k, out_c, in_c, ksz):
        k1, k2 = jax.random.split(k)
        bound = 1.0 / np.sqrt(in_c * ksz)
        w = jax.random.uniform(k1, (out_c, in_c, ksz), jnp.float32, -bound, bound)
        b = jax.random.uniform(k2, (out_c,), jnp.float32, -bound, bound)
        return w, b

    keys = jax.random.split(key, 7 + 2 * N_USER)
    Pm = {}
    Pm["lin0_w"], Pm["lin0_b"] = linear(keys[0], CD, CD)
    Pm["conv1_w"], Pm["conv1_b"] = conv(keys[1], N_CHANNEL, 1, 2)
    Pm["conv2_w"], Pm["conv2_b"] = conv(keys[2], N_CHANNEL, N_CHANNEL, K2)
    Pm["conv3_w"], Pm["conv3_b"] = conv(keys[3], N_CHANNEL, N_CHANNEL, 2)
    Pm["conv4_w"], Pm["conv4_b"] = conv(keys[4], N_CHANNEL, N_CHANNEL, 2)
    Pm["lin5_w"], Pm["lin5_b"] = linear(keys[5], H2, FLAT)
    Pm["lin6_w"], Pm["lin6_b"] = linear(keys[6], H2, H2)
    dw0, db0, dw1, db1 = [], [], [], []
    for u in range(N_USER):
        w0, b0 = linear(keys[7 + 2 * u], CD, H2)
        w1, b1 = linear(keys[8 + 2 * u], M, CD)
        dw0.append(w0); db0.append(b0); dw1.append(w1); db1.append(b1)
    Pm["dec_w0"] = jnp.stack(dw0); Pm["dec_b0"] = jnp.stack(db0)
    Pm["dec_w1"] = jnp.stack(dw1); Pm["dec_b1"] = jnp.stack(db1)
    return Pm


# ---- glue: fold a Conv1d(w:(O,I,K), b:(O,), stride) into a dense matrix ------
def conv_to_dense(w, b, lin, stride):
    w = np.asarray(w, np.float32)
    b = np.asarray(b, np.float32)
    cout, cin, K = w.shape
    lout = (lin - K) // stride + 1
    Wm = np.zeros((cin * lin, cout * lout), np.float32)
    for o in range(cout):
        for c in range(cin):
            for k in range(K):
                for t in range(lout):
                    Wm[c * lin + t * stride + k, o * lout + t] += w[o, c, k]
    bm = np.repeat(b, lout)[None, :].astype(np.float32)   # channel-major flatten (matches torch)
    return Wm, bm, lout


def build_layer_chain(Pm, i):
    layers = [(np.asarray(Pm["lin0_w"]).T, np.asarray(Pm["lin0_b"])[None, :])]
    lin = CD
    for (w, b, s) in [(Pm["conv1_w"], Pm["conv1_b"], 1),
                      (Pm["conv2_w"], Pm["conv2_b"], 2),
                      (Pm["conv3_w"], Pm["conv3_b"], 1),
                      (Pm["conv4_w"], Pm["conv4_b"], 1)]:
        Wm, bm, lin = conv_to_dense(w, b, lin, s)
        layers.append((Wm, bm))
    layers.append((np.asarray(Pm["lin5_w"]).T, np.asarray(Pm["lin5_b"])[None, :]))
    layers.append((np.asarray(Pm["lin6_w"]).T, np.asarray(Pm["lin6_b"])[None, :]))
    layers.append((np.asarray(Pm["dec_w0"][i]).T, np.asarray(Pm["dec_b0"][i])[None, :]))
    layers.append((np.asarray(Pm["dec_w1"][i]).T, np.asarray(Pm["dec_b1"][i])[None, :]))
    return layers


def pack_params(Pm, i):
    """Pack all 9 (W, b) into zero-padded bf16[9,P,P] / f32[9,1,P] tensors."""
    layers = build_layer_chain(Pm, i)
    assert len(layers) == N_LAYERS
    Wp = np.zeros((N_LAYERS, P, P), np.float32)
    Bp = np.zeros((N_LAYERS, 1, P), np.float32)
    for li, (w, b) in enumerate(layers):
        w = np.asarray(w, np.float32)
        b = np.asarray(b, np.float32).reshape(-1)
        Wp[li, :w.shape[0], :w.shape[1]] = w
        Bp[li, 0, :b.shape[0]] = b
    return jnp.asarray(Wp, jnp.bfloat16), jnp.asarray(Bp, jnp.float32)


def wireless_decoder_forward(x, Pm, i, *, tb=256):
    B = x.shape[0]
    assert B % tb == 0, "pick batch a multiple of the batch tile for this demo"
    Wp, Bp = pack_params(Pm, i)
    x_pad = jnp.pad(x.astype(jnp.float32), ((0, 0), (0, P - CD)))

    grid = (pl.cdiv(B, tb),)
    cost = pl.CostEstimate(
        flops=2 * B * N_LAYERS * P * P,
        transcendentals=(N_LAYERS - 1) * B * P,
        bytes_accessed=B * P * 4 + B * M * 4 + Wp.size * 2 + Bp.size * 4,
    )
    return pl.pallas_call(
        decoder_kernel,
        out_shape=jax.ShapeDtypeStruct((B, M), jnp.float32),
        grid=grid,
        in_specs=[
            pl.BlockSpec((tb, P), lambda b: (b, 0)),                 # batch-tiled activations
            pl.BlockSpec((N_LAYERS, P, P), lambda b: (0, 0, 0)),     # weights: VMEM-resident
            pl.BlockSpec((N_LAYERS, 1, P), lambda b: (0, 0, 0)),     # biases: VMEM-resident
        ],
        out_specs=pl.BlockSpec((tb, M), lambda b: (b, 0)),
        compiler_params=pltpu.CompilerParams(
            dimension_semantics=("parallel",)),                      # megacore split on v7x
        cost_estimate=cost,
    )(x_pad, Wp, Bp)


# ---- pure-JAX reference (mirrors the torch module, full f32 precision) -------
def reference_forward(x, Pm, i):
    def conv(h, w, b, s):
        y = jax.lax.conv_general_dilated(
            h, w, window_strides=(s,), padding="VALID",
            dimension_numbers=("NCH", "OIH", "NCH"), precision=_PREC)
        return y + b[None, :, None]

    h = jnp.tanh(jnp.dot(x, Pm["lin0_w"].T, precision=_PREC) + Pm["lin0_b"])
    h = h[:, None, :]                                   # Unflatten(1, (1, -1))
    h = jnp.tanh(conv(h, Pm["conv1_w"], Pm["conv1_b"], 1))
    h = jnp.tanh(conv(h, Pm["conv2_w"], Pm["conv2_b"], 2))
    h = jnp.tanh(conv(h, Pm["conv3_w"], Pm["conv3_b"], 1))
    h = jnp.tanh(conv(h, Pm["conv4_w"], Pm["conv4_b"], 1))
    h = h.reshape(h.shape[0], -1)                       # Flatten (channel-major)
    h = jnp.tanh(jnp.dot(h, Pm["lin5_w"].T, precision=_PREC) + Pm["lin5_b"])
    h = jnp.tanh(jnp.dot(h, Pm["lin6_w"].T, precision=_PREC) + Pm["lin6_b"])
    h = jnp.tanh(jnp.dot(h, Pm["dec_w0"][i].T, precision=_PREC) + Pm["dec_b0"][i])
    return jnp.dot(h, Pm["dec_w1"][i].T, precision=_PREC) + Pm["dec_b1"][i]


if __name__ == "__main__":
    # TODO(synk): the `if False:` complex channel-inversion branch in forward() is dead code
    # and is intentionally not implemented.
    key = jax.random.PRNGKey(0)
    pkey, xkey = jax.random.split(key)
    params = init_params(pkey)

    B = 512                 # batch grid of 2 steps at TB=256 (exercises pipelining/megacore)
    x = jax.random.normal(xkey, (B, CD), jnp.float32)
    user_idx = 0

    out = wireless_decoder_forward(x, params, user_idx, tb=256)
    out = jax.block_until_ready(out)

    ref = reference_forward(x, params, user_idx)
    assert out.shape == (B, M)
    # bf16 single-pass MXU with f32 accumulation vs f32 HIGHEST reference.
    np.testing.assert_allclose(np.asarray(out), np.asarray(ref), rtol=2e-2, atol=2e-2)
    print("KERNEL_OK")
</pallas_src>

<mosaic_0001>
module attributes {stable_mosaic.version = 11 : i64} {
  func.func @decoder_kernel(%arg0: i32, %arg1: memref<256x64xf32, #tpu.memory_space<vmem>>, %arg2: memref<9x64x64xbf16, #tpu.memory_space<vmem>>, %arg3: memref<9x1x64xf32, #tpu.memory_space<vmem>>, %arg4: memref<256x16xf32, #tpu.memory_space<vmem>>) attributes {dimension_semantics = [#tpu.dimension_semantics<parallel>], iteration_bounds = array<i64: 2>, scalar_prefetch = 0 : i64, scratch_operands = 0 : i64, tpu.core_type = #tpu.core_type<tc>, window_params = [{transform_indices = @transform_0, window_bounds = array<i64: 256, 64>}, {pipeline_mode = #tpu.pipeline_mode<synchronous>, transform_indices = @transform_1, window_bounds = array<i64: 9, 64, 64>}, {pipeline_mode = #tpu.pipeline_mode<synchronous>, transform_indices = @transform_2, window_bounds = array<i64: 9, 1, 64>}, {transform_indices = @transform_3, window_bounds = array<i64: 256, 16>}]} {
    %c0 = arith.constant 0 : index
    %c0_0 = arith.constant 0 : index
    %0 = vector.load %arg1[%c0, %c0_0] : memref<256x64xf32, #tpu.memory_space<vmem>>, vector<256x64xf32>
    %c0_1 = arith.constant 0 : index
    %c0_2 = arith.constant 0 : index
    %c0_3 = arith.constant 0 : index
    %1 = vector.load %arg2[%c0_1, %c0_2, %c0_3] : memref<9x64x64xbf16, #tpu.memory_space<vmem>>, vector<1x64x64xbf16>
    %2 = vector.shape_cast %1 : vector<1x64x64xbf16> to vector<64x64xbf16>
    %c0_4 = arith.constant 0 : index
    %c0_5 = arith.constant 0 : index
    %c0_6 = arith.constant 0 : index
    %3 = vector.load %arg3[%c0_4, %c0_5, %c0_6] : memref<9x1x64xf32, #tpu.memory_space<vmem>>, vector<1x1x64xf32>
    %4 = vector.shape_cast %3 : vector<1x1x64xf32> to vector<1x64xf32>
    %5 = arith.truncf %0 : vector<256x64xf32> to vector<256x64xbf16>
    %cst = arith.constant dense<0.000000e+00> : vector<256x64xf32>
    %6 = tpu.matmul %5, %2, %cst {dimension_numbers = #tpu.dot_dimension_numbers<[1], [0], [0], [1], [0, 0, 1, 1], [], []>} : vector<256x64xbf16>, vector<64x64xbf16>, vector<256x64xf32> -> vector<256x64xf32>
    %7 = vector.broadcast %4 : vector<1x64xf32> to vector<256x64xf32>
    %8 = arith.addf %6, %7 : vector<256x64xf32>
    %9 = math.tanh %8 : vector<256x64xf32>
    %c1 = arith.constant 1 : index
    %c0_7 = arith.constant 0 : index
    %c0_8 = arith.constant 0 : index
    %10 = vector.load %arg2[%c1, %c0_7, %c0_8] : memref<9x64x64xbf16, #tpu.memory_space<vmem>>, vector<1x64x64xbf16>
    %11 = vector.shape_cast %10 : vector<1x64x64xbf16> to vector<64x64xbf16>
    %c1_9 = arith.constant 1 : index
    %c0_10 = arith.constant 0 : index
    %c0_11 = arith.constant 0 : index
    %12 = vector.load %arg3[%c1_9, %c0_10, %c0_11] : memref<9x1x64xf32, #tpu.memory_space<vmem>>, vector<1x1x64xf32>
    %13 = vector.shape_cast %12 : vector<1x1x64xf32> to vector<1x64xf32>
    %14 = arith.truncf %9 : vector<256x64xf32> to vector<256x64xbf16>
    %cst_12 = arith.constant dense<0.000000e+00> : vector<256x64xf32>
    %15 = tpu.matmul %14, %11, %cst_12 {dimension_numbers = #tpu.dot_dimension_numbers<[1], [0], [0], [1], [0, 0, 1, 1], [], []>} : vector<256x64xbf16>, vector<64x64xbf16>, vector<256x64xf32> -> vector<256x64xf32>
    %16 = vector.broadcast %13 : vector<1x64xf32> to vector<256x64xf32>
    %17 = arith.addf %15, %16 : vector<256x64xf32>
    %18 = math.tanh %17 : vector<256x64xf32>
    %c2 = arith.constant 2 : index
    %c0_13 = arith.constant 0 : index
    %c0_14 = arith.constant 0 : index
    %19 = vector.load %arg2[%c2, %c0_13, %c0_14] : memref<9x64x64xbf16, #tpu.memory_space<vmem>>, vector<1x64x64xbf16>
    %20 = vector.shape_cast %19 : vector<1x64x64xbf16> to vector<64x64xbf16>
    %c2_15 = arith.constant 2 : index
    %c0_16 = arith.constant 0 : index
    %c0_17 = arith.constant 0 : index
    %21 = vector.load %arg3[%c2_15, %c0_16, %c0_17] : memref<9x1x64xf32, #tpu.memory_space<vmem>>, vector<1x1x64xf32>
    %22 = vector.shape_cast %21 : vector<1x1x64xf32> to vector<1x64xf32>
    %23 = arith.truncf %18 : vector<256x64xf32> to vector<256x64xbf16>
    %cst_18 = arith.constant dense<0.000000e+00> : vector<256x64xf32>
    %24 = tpu.matmul %23, %20, %cst_18 {dimension_numbers = #tpu.dot_dimension_numbers<[1], [0], [0], [1], [0, 0, 1, 1], [], []>} : vector<256x64xbf16>, vector<64x64xbf16>, vector<256x64xf32> -> vector<256x64xf32>
    %25 = vector.broadcast %22 : vector<1x64xf32> to vector<256x64xf32>
    %26 = arith.addf %24, %25 : vector<256x64xf32>
    %27 = math.tanh %26 : vector<256x64xf32>
    %c3 = arith.constant 3 : index
    %c0_19 = arith.constant 0 : index
    %c0_20 = arith.constant 0 : index
    %28 = vector.load %arg2[%c3, %c0_19, %c0_20] : memref<9x64x64xbf16, #tpu.memory_space<vmem>>, vector<1x64x64xbf16>
    %29 = vector.shape_cast %28 : vector<1x64x64xbf16> to vector<64x64xbf16>
    %c3_21 = arith.constant 3 : index
    %c0_22 = arith.constant 0 : index
    %c0_23 = arith.constant 0 : index
    %30 = vector.load %arg3[%c3_21, %c0_22, %c0_23] : memref<9x1x64xf32, #tpu.memory_space<vmem>>, vector<1x1x64xf32>
    %31 = vector.shape_cast %30 : vector<1x1x64xf32> to vector<1x64xf32>
    %32 = arith.truncf %27 : vector<256x64xf32> to vector<256x64xbf16>
    %cst_24 = arith.constant dense<0.000000e+00> : vector<256x64xf32>
    %33 = tpu.matmul %32, %29, %cst_24 {dimension_numbers = #tpu.dot_dimension_numbers<[1], [0], [0], [1], [0, 0, 1, 1], [], []>} : vector<256x64xbf16>, vector<64x64xbf16>, vector<256x64xf32> -> vector<256x64xf32>
    %34 = vector.broadcast %31 : vector<1x64xf32> to vector<256x64xf32>
    %35 = arith.addf %33, %34 : vector<256x64xf32>
    %36 = math.tanh %35 : vector<256x64xf32>
    %c4 = arith.constant 4 : index
    %c0_25 = arith.constant 0 : index
    %c0_26 = arith.constant 0 : index
    %37 = vector.load %arg2[%c4, %c0_25, %c0_26] : memref<9x64x64xbf16, #tpu.memory_space<vmem>>, vector<1x64x64xbf16>
    %38 = vector.shape_cast %37 : vector<1x64x64xbf16> to vector<64x64xbf16>
    %c4_27 = arith.constant 4 : index
    %c0_28 = arith.constant 0 : index
    %c0_29 = arith.constant 0 : index
    %39 = vector.load %arg3[%c4_27, %c0_28, %c0_29] : memref<9x1x64xf32, #tpu.memory_space<vmem>>, vector<1x1x64xf32>
    %40 = vector.shape_cast %39 : vector<1x1x64xf32> to vector<1x64xf32>
    %41 = arith.truncf %36 : vector<256x64xf32> to vector<256x64xbf16>
    %cst_30 = arith.constant dense<0.000000e+00> : vector<256x64xf32>
    %42 = tpu.matmul %41, %38, %cst_30 {dimension_numbers = #tpu.dot_dimension_numbers<[1], [0], [0], [1], [0, 0, 1, 1], [], []>} : vector<256x64xbf16>, vector<64x64xbf16>, vector<256x64xf32> -> vector<256x64xf32>
    %43 = vector.broadcast %40 : vector<1x64xf32> to vector<256x64xf32>
    %44 = arith.addf %42, %43 : vector<256x64xf32>
    %45 = math.tanh %44 : vector<256x64xf32>
    %c5 = arith.constant 5 : index
    %c0_31 = arith.constant 0 : index
    %c0_32 = arith.constant 0 : index
    %46 = vector.load %arg2[%c5, %c0_31, %c0_32] : memref<9x64x64xbf16, #tpu.memory_space<vmem>>, vector<1x64x64xbf16>
    %47 = vector.shape_cast %46 : vector<1x64x64xbf16> to vector<64x64xbf16>
    %c5_33 = arith.constant 5 : index
    %c0_34 = arith.constant 0 : index
    %c0_35 = arith.constant 0 : index
    %48 = vector.load %arg3[%c5_33, %c0_34, %c0_35] : memref<9x1x64xf32, #tpu.memory_space<vmem>>, vector<1x1x64xf32>
    %49 = vector.shape_cast %48 : vector<1x1x64xf32> to vector<1x64xf32>
    %50 = arith.truncf %45 : vector<256x64xf32> to vector<256x64xbf16>
    %cst_36 = arith.constant dense<0.000000e+00> : vector<256x64xf32>
    %51 = tpu.matmul %50, %47, %cst_36 {dimension_numbers = #tpu.dot_dimension_numbers<[1], [0], [0], [1], [0, 0, 1, 1], [], []>} : vector<256x64xbf16>, vector<64x64xbf16>, vector<256x64xf32> -> vector<256x64xf32>
    %52 = vector.broadcast %49 : vector<1x64xf32> to vector<256x64xf32>
    %53 = arith.addf %51, %52 : vector<256x64xf32>
    %54 = math.tanh %53 : vector<256x64xf32>
    %c6 = arith.constant 6 : index
    %c0_37 = arith.constant 0 : index
    %c0_38 = arith.constant 0 : index
    %55 = vector.load %arg2[%c6, %c0_37, %c0_38] : memref<9x64x64xbf16, #tpu.memory_space<vmem>>, vector<1x64x64xbf16>
    %56 = vector.shape_cast %55 : vector<1x64x64xbf16> to vector<64x64xbf16>
    %c6_39 = arith.constant 6 : index
    %c0_40 = arith.constant 0 : index
    %c0_41 = arith.constant 0 : index
    %57 = vector.load %arg3[%c6_39, %c0_40, %c0_41] : memref<9x1x64xf32, #tpu.memory_space<vmem>>, vector<1x1x64xf32>
    %58 = vector.shape_cast %57 : vector<1x1x64xf32> to vector<1x64xf32>
    %59 = arith.truncf %54 : vector<256x64xf32> to vector<256x64xbf16>
    %cst_42 = arith.constant dense<0.000000e+00> : vector<256x64xf32>
    %60 = tpu.matmul %59, %56, %cst_42 {dimension_numbers = #tpu.dot_dimension_numbers<[1], [0], [0], [1], [0, 0, 1, 1], [], []>} : vector<256x64xbf16>, vector<64x64xbf16>, vector<256x64xf32> -> vector<256x64xf32>
    %61 = vector.broadcast %58 : vector<1x64xf32> to vector<256x64xf32>
    %62 = arith.addf %60, %61 : vector<256x64xf32>
    %63 = math.tanh %62 : vector<256x64xf32>
    %c7 = arith.constant 7 : index
    %c0_43 = arith.constant 0 : index
    %c0_44 = arith.constant 0 : index
    %64 = vector.load %arg2[%c7, %c0_43, %c0_44] : memref<9x64x64xbf16, #tpu.memory_space<vmem>>, vector<1x64x64xbf16>
    %65 = vector.shape_cast %64 : vector<1x64x64xbf16> to vector<64x64xbf16>
    %c7_45 = arith.constant 7 : index
    %c0_46 = arith.constant 0 : index
    %c0_47 = arith.constant 0 : index
    %66 = vector.load %arg3[%c7_45, %c0_46, %c0_47] : memref<9x1x64xf32, #tpu.memory_space<vmem>>, vector<1x1x64xf32>
    %67 = vector.shape_cast %66 : vector<1x1x64xf32> to vector<1x64xf32>
    %68 = arith.truncf %63 : vector<256x64xf32> to vector<256x64xbf16>
    %cst_48 = arith.constant dense<0.000000e+00> : vector<256x64xf32>
    %69 = tpu.matmul %68, %65, %cst_48 {dimension_numbers = #tpu.dot_dimension_numbers<[1], [0], [0], [1], [0, 0, 1, 1], [], []>} : vector<256x64xbf16>, vector<64x64xbf16>, vector<256x64xf32> -> vector<256x64xf32>
    %70 = vector.broadcast %67 : vector<1x64xf32> to vector<256x64xf32>
    %71 = arith.addf %69, %70 : vector<256x64xf32>
    %72 = math.tanh %71 : vector<256x64xf32>
    %c8 = arith.constant 8 : index
    %c0_49 = arith.constant 0 : index
    %c0_50 = arith.constant 0 : index
    %73 = vector.load %arg2[%c8, %c0_49, %c0_50] : memref<9x64x64xbf16, #tpu.memory_space<vmem>>, vector<1x64x64xbf16>
    %74 = vector.shape_cast %73 : vector<1x64x64xbf16> to vector<64x64xbf16>
    %c8_51 = arith.constant 8 : index
    %c0_52 = arith.constant 0 : index
    %c0_53 = arith.constant 0 : index
    %75 = vector.load %arg3[%c8_51, %c0_52, %c0_53] : memref<9x1x64xf32, #tpu.memory_space<vmem>>, vector<1x1x64xf32>
    %76 = vector.shape_cast %75 : vector<1x1x64xf32> to vector<1x64xf32>
    %77 = arith.truncf %72 : vector<256x64xf32> to vector<256x64xbf16>
    %cst_54 = arith.constant dense<0.000000e+00> : vector<256x64xf32>
    %78 = tpu.matmul %77, %74, %cst_54 {dimension_numbers = #tpu.dot_dimension_numbers<[1], [0], [0], [1], [0, 0, 1, 1], [], []>} : vector<256x64xbf16>, vector<64x64xbf16>, vector<256x64xf32> -> vector<256x64xf32>
    %79 = vector.broadcast %76 : vector<1x64xf32> to vector<256x64xf32>
    %80 = arith.addf %78, %79 : vector<256x64xf32>
    %81 = vector.extract_strided_slice %80 {offsets = [0, 0], sizes = [256, 16], strides = [1, 1]} : vector<256x64xf32> to vector<256x16xf32>
    %c0_55 = arith.constant 0 : index
    %c0_56 = arith.constant 0 : index
    %82 = vector.load %arg4[%c0_55, %c0_56] : memref<256x16xf32, #tpu.memory_space<vmem>>, vector<256x16xf32>
    tpu.vector_store %arg4[%c0_55, %c0_56], %81 {strides = array<i32>} : memref<256x16xf32, #tpu.memory_space<vmem>>, vector<256x16xf32>,
    return
  }
  func.func @transform_0(%arg0: i32) -> (i32, i32) {
    %c0_i32 = arith.constant 0 : i32
    %c0_i32_0 = arith.constant 0 : i32
    return %arg0, %c0_i32 : i32, i32
  }
  func.func @transform_1(%arg0: i32) -> (i32, i32, i32) {
    %c0_i32 = arith.constant 0 : i32
    %c0_i32_0 = arith.constant 0 : i32
    %c0_i32_1 = arith.constant 0 : i32
    %c0_i32_2 = arith.constant 0 : i32
    return %c0_i32, %c0_i32_0, %c0_i32_1 : i32, i32, i32
  }
  func.func @transform_2(%arg0: i32) -> (i32, i32, i32) {
    %c0_i32 = arith.constant 0 : i32
    %c0_i32_0 = arith.constant 0 : i32
    %c0_i32_1 = arith.constant 0 : i32
    %c0_i32_2 = arith.constant 0 : i32
    return %c0_i32, %c0_i32_0, %c0_i32_1 : i32, i32, i32
  }
  func.func @transform_3(%arg0: i32) -> (i32, i32) {
    %c0_i32 = arith.constant 0 : i32
    %c0_i32_0 = arith.constant 0 : i32
    return %arg0, %c0_i32 : i32, i32
  }
}

</mosaic_0001>

<llo_original>
// kernel: tpu_custom_call.1
$region0: #{tpu_custom_call.1}
  #allocation0 [shape = 'u32[]', space=smem, size = 0x4, offset = 0x4, fixed_abs, tag = 'smem constant byte address 0x4 - core index']
  #allocation1 [shape = 'u32[144,128]{1,0:T(1,128)}', space=vmem, size = 0x12000, scoped, tag = 'internal scratch']
  %s0 = inlined_call_operand.vmem [shape: f32[512,64], index: 0, kind: input, shape index: {}]
  %s1 = inlined_call_operand.vmem [shape: bf16[9,64,64], index: 1, kind: input, shape index: {}]
  %s2 = inlined_call_operand.vmem [shape: f32[9,1,64], index: 2, kind: input, shape index: {}]
  %s3 = inlined_call_operand.vmem [shape: f32[512,16], index: 3, kind: output, shape index: {}]
  %s4 = sld [smem:[#allocation0]]
  $region45: #{tpu_custom_call.1} parent=0
    _
  %s6 = ssub.s32 1, %s4
  %s7 = scalar_select 0, %s6, %s4
  loop: start=0, step=1, limit=4
  $region2: #{tpu_custom_call.1} parent=0 // loop_pre_header
    _
  $region3: #{tpu_custom_call.1} parent=0 // loop_header
    %s9 = sphi 0, %s13
    %p10 = scmp.ge.s32.totalorder %s9, 4
    %s19 = sphi 0, %s21
    %s22 = sphi 0, %s19
    %s23 = sphi 0, %s22
    %s39 = sphi 0, %s23
    %s43 = sphi 0, %s43
    %s45 = sphi 0, %s43
    %s46 = sphi 0, %s45
    %s60 = sphi 0, %s46
    %s64 = sphi 0, %s64
    %s66 = sphi 0, %s64
    %s67 = sphi 0, %s66
    %s81 = sphi 0, %s67
    %s87 = sphi 0, %s89
    %s90 = sphi 0, %s87
    %s91 = sphi 0, %s90
    %s107 = sphi 0, %s91
  $region4: #{tpu_custom_call.1} parent=0 // loop_header_branch
    %12 = sbr.rel (%p10) target = $region8
  $region5: #{tpu_custom_call.1} parent=0 // loop_body
    %s14 = ssub.s32 %s9, 1
    %s15 = ssub.s32 %s9, 2
    %s16 = sadd.s32 %s9, 1
    %s17 = ssub.s32 %s9, %s16
    %p18 = scmp.eq.s32.totalorder %s17, 0
    %s20 = sadd.s32 %s19, 1
    %s21 = scalar_select %p18, %s19, %s20
    %p24 = pneg %p18
    %p25 = scmp.eq.s32.totalorder %s9, 1
    %p26 = por %p24, %p25
    %p27 = scmp.ne.s32.totalorder %s19, %s22
    %p28 = scmp.eq.s32.totalorder %s9, 0
    %p29 = por %p27, %p28
    %p30 = scmp.ne.s32.totalorder %s19, %s22
    %p31 = scmp.eq.s32.totalorder %s14, 1
    %p32 = por %p30, %p31
    %p33 = scmp.ne.s32.totalorder %s22, %s23
    %p34 = scmp.eq.s32.totalorder %s14, 0
    %p35 = por %p33, %p34
    %p36 = scmp.ne.s32.totalorder %s22, %s23
    %p37 = scmp.eq.s32.totalorder %s15, 1
    %p38 = por %p36, %p37
    %p40 = scmp.ne.s32.totalorder %s23, %s39
    %p41 = scmp.eq.s32.totalorder %s15, 0
    %p42 = por %p40, %p41
    %s44 = sadd.s32 %s43, 1
    %p47 = scmp.eq.s32.totalorder %s9, 1
    %p48 = scmp.ne.s32.totalorder %s43, %s45
    %p49 = scmp.eq.s32.totalorder %s9, 0
    %p50 = por %p48, %p49
    %p51 = scmp.ne.s32.totalorder %s43, %s45
    %p52 = scmp.eq.s32.totalorder %s14, 1
    %p53 = por %p51, %p52
    %p54 = scmp.ne.s32.totalorder %s45, %s46
    %p55 = scmp.eq.s32.totalorder %s14, 0
    %p56 = por %p54, %p55
    %p57 = scmp.ne.s32.totalorder %s45, %s46
    %p58 = scmp.eq.s32.totalorder %s15, 1
    %p59 = por %p57, %p58
    %p61 = scmp.ne.s32.totalorder %s46, %s60
    %p62 = scmp.eq.s32.totalorder %s15, 0
    %p63 = por %p61, %p62
    %s65 = sadd.s32 %s64, 1
    %p68 = scmp.eq.s32.totalorder %s9, 1
    %p69 = scmp.ne.s32.totalorder %s64, %s66
    %p70 = scmp.eq.s32.totalorder %s9, 0
    %p71 = por %p69, %p70
    %p72 = scmp.ne.s32.totalorder %s64, %s66
    %p73 = scmp.eq.s32.totalorder %s14, 1
    %p74 = por %p72, %p73
    %p75 = scmp.ne.s32.totalorder %s66, %s67
    %p76 = scmp.eq.s32.totalorder %s14, 0
    %p77 = por %p75, %p76
    %p78 = scmp.ne.s32.totalorder %s66, %s67
    %p79 = scmp.eq.s32.totalorder %s15, 1
    %p80 = por %p78, %p79
    %p82 = scmp.ne.s32.totalorder %s67, %s81
    %p83 = scmp.eq.s32.totalorder %s15, 0
    %p84 = por %p82, %p83
    %s85 = ssub.s32 %s9, %s16
    %p86 = scmp.eq.s32.totalorder %s85, 0
    %s88 = sadd.s32 %s87, 1
    %s89 = scalar_select %p86, %s87, %s88
    %p92 = pneg %p86
    %p93 = scmp.eq.s32.totalorder %s9, 1
    %p94 = por %p92, %p93
    %p95 = scmp.ne.s32.totalorder %s87, %s90
    %p96 = scmp.eq.s32.totalorder %s9, 0
    %p97 = por %p95, %p96
    %p98 = scmp.ne.s32.totalorder %s87, %s90
    %p99 = scmp.eq.s32.totalorder %s14, 1
    %p100 = por %p98, %p99
    %p101 = scmp.ne.s32.totalorder %s90, %s91
    %p102 = scmp.eq.s32.totalorder %s14, 0
    %p103 = por %p101, %p102
    %p104 = scmp.ne.s32.totalorder %s90, %s91
    %p105 = scmp.eq.s32.totalorder %s15, 1
    %p106 = por %p104, %p105
    %p108 = scmp.ne.s32.totalorder %s91, %s107
    %p109 = scmp.eq.s32.totalorder %s15, 0
    %p110 = por %p108, %p109
    %p111 = scmp.le.s32.totalorder 1, %s9
    %p112 = scmp.lt.s32.totalorder %s9, 3
    %p113 = pnand %p111, %p112
    %p114 = pneg %p113
    // Predicated region
    $region9: #{tpu_custom_call.1} parent=5 // pred_check
      _
    $region10: #{tpu_custom_call.1} parent=5 // pred_check_branch
      %116 = sbr.rel (%p113) target = $region12
    $region11: #{tpu_custom_call.1} parent=5 // pred_region
      %s117 = ssub.s32 %s9, 1
      // Predicated region
      $region13: #{tpu_custom_call.1} parent=11 // pred_check
        %p118 = pneg %p56
      $region14: #{tpu_custom_call.1} parent=11 // pred_check_branch
        %120 = sbr.rel (%p118) target = $region16
      $region15: #{tpu_custom_call.1} parent=11 // pred_region
        _
      $region16: #{tpu_custom_call.1} parent=11 // pred_fallthru
        _
      // Predicated region
      $region17: #{tpu_custom_call.1} parent=11 // pred_check
        %p121 = pneg %p77
      $region18: #{tpu_custom_call.1} parent=11 // pred_check_branch
        %123 = sbr.rel (%p121) target = $region20
      $region19: #{tpu_custom_call.1} parent=11 // pred_region
        _
      $region20: #{tpu_custom_call.1} parent=11 // pred_fallthru
        _
    $region12: #{tpu_custom_call.1} parent=5 // pred_fallthru
      _
    %p124 = scmp.lt.s32.totalorder %s9, 2
    // Predicated region
    $region21: #{tpu_custom_call.1} parent=5 // pred_check
      %p125 = pneg %p124
    $region22: #{tpu_custom_call.1} parent=5 // pred_check_branch
      %127 = sbr.rel (%p125) target = $region24
    $region23: #{tpu_custom_call.1} parent=5 // pred_region
      // Predicated region
      $region25: #{tpu_custom_call.1} parent=23 // pred_check
        %p128 = pneg %p29
      $region26: #{tpu_custom_call.1} parent=23 // pred_check_branch
        %130 = sbr.rel (%p128) target = $region28
      $region27: #{tpu_custom_call.1} parent=23 // pred_region
        %s131 = smul.u32 32, %s9
        %p132 = scmp.lt.s32.totalorder %s131, 63
        %s133 = scalar_select %p132, %s131, 63
        %s134 = smul.addr %s133, 8
        %s135 = scalar_lea.vmem %s0, %s134
        %s136 = smul.u32 32, %s9
      $region28: #{tpu_custom_call.1} parent=23 // pred_fallthru
        _
    $region24: #{tpu_custom_call.1} parent=5 // pred_fallthru
      _
    %p137 = scmp.le.s32.totalorder 1, %s9
    %p138 = scmp.lt.s32.totalorder %s9, 3
    %p139 = pnand %p137, %p138
    %p140 = pneg %p139
    // Predicated region
    $region29: #{tpu_custom_call.1} parent=5 // pred_check
      _
    $region30: #{tpu_custom_call.1} parent=5 // pred_check_branch
      %142 = sbr.rel (%p139) target = $region32
    $region31: #{tpu_custom_call.1} parent=5 // pred_region
      %s143 = ssub.s32 %s9, 1
      %s144 = smul.u32 32, %s14
      %p145 = scmp.lt.s32.totalorder %s144, 63
      %s146 = scalar_select %p145, %s144, 63
      %s147 = smul.addr %s146, 8
      %s148 = scalar_lea.vmem %s0, %s147
      %p149 = pneg %p35
      %p150 = pneg %p32
      %p151 = pneg %p56
      %p152 = pneg %p53
      %p153 = pneg %p77
      %p154 = pneg %p74
      %p155 = pneg %p103
      %p156 = pneg %p100
      %s157 = smul.u32 32, %s14
      %p158 = scmp.lt.s32.totalorder %s157, 63
      %s159 = scalar_select %p158, %s157, 63
      %s160 = smul.addr %s159, 8
      %s161 = scalar_lea.vmem %s3, %s160
      %s162 = smul.u32 32, %s14
      %p163 = scmp.lt.s32.totalorder %s162, 63
      %s164 = scalar_select %p163, %s162, 63
      %s165 = smul.addr %s164, 8
      %s166 = scalar_lea.vmem %s0, %s165
      %s167 = smul.u32 32, %s14
      %s168 = smul.u32 32, %s14
      %p169 = scmp.lt.s32.totalorder %s168, 63
      %s170 = scalar_select %p169, %s168, 63
      %s171 = smul.addr %s170, 8
      %s172 = scalar_lea.vmem %s3, %s171
      %s173 = smul.u32 32, %s14
      %v175 = vld [vmem:[%s166] sm:$0xff]
      %v176 = vld [vmem:[%s166 + $0x8] sm:$0xff]
      %v177 = vld [vmem:[%s166 + $0x10] sm:$0xff]
      %v178 = vld [vmem:[%s166 + $0x18] sm:$0xff]
      %v179 = vld [vmem:[%s166 + $0x20] sm:$0xff]
      %v180 = vld [vmem:[%s166 + $0x28] sm:$0xff]
      %v181 = vld [vmem:[%s166 + $0x30] sm:$0xff]
      %v182 = vld [vmem:[%s166 + $0x38] sm:$0xff]
      %v183 = vld [vmem:[%s166 + $0x40] sm:$0xff]
      %v184 = vld [vmem:[%s166 + $0x48] sm:$0xff]
      %v185 = vld [vmem:[%s166 + $0x50] sm:$0xff]
      %v186 = vld [vmem:[%s166 + $0x58] sm:$0xff]
      %v187 = vld [vmem:[%s166 + $0x60] sm:$0xff]
      %v188 = vld [vmem:[%s166 + $0x68] sm:$0xff]
      %v189 = vld [vmem:[%s166 + $0x70] sm:$0xff]
      %v190 = vld [vmem:[%s166 + $0x78] sm:$0xff]
      %v191 = vld [vmem:[%s166 + $0x80] sm:$0xff]
      %v192 = vld [vmem:[%s166 + $0x88] sm:$0xff]
      %v193 = vld [vmem:[%s166 + $0x90] sm:$0xff]
      %v194 = vld [vmem:[%s166 + $0x98] sm:$0xff]
      %v195 = vld [vmem:[%s166 + $0xa0] sm:$0xff]
      %v196 = vld [vmem:[%s166 + $0xa8] sm:$0xff]
      %v197 = vld [vmem:[%s166 + $0xb0] sm:$0xff]
      %v198 = vld [vmem:[%s166 + $0xb8] sm:$0xff]
      %v199 = vld [vmem:[%s166 + $0xc0] sm:$0xff]
      %v200 = vld [vmem:[%s166 + $0xc8] sm:$0xff]
      %v201 = vld [vmem:[%s166 + $0xd0] sm:$0xff]
      %v202 = vld [vmem:[%s166 + $0xd8] sm:$0xff]
      %v203 = vld [vmem:[%s166 + $0xe0] sm:$0xff]
      %v204 = vld [vmem:[%s166 + $0xe8] sm:$0xff]
      %v205 = vld [vmem:[%s166 + $0xf0] sm:$0xff]
      %v206 = vld [vmem:[%s166 + $0xf8] sm:$0xff]
      %v207 = vld [vmem:[%s1] sm:$0xf]
      %v208 = vld [vmem:[%s1 + $0x4] sm:$0xf]
      %v209 = vld [vmem:[%s1 + $0x8] sm:$0xf]
      %v210 = vld [vmem:[%s1 + $0xc] sm:$0xf]
      %v211 = vld [vmem:[%s1 + $0x10] sm:$0xf]
      %v212 = vld [vmem:[%s1 + $0x14] sm:$0xf]
      %v213 = vld [vmem:[%s1 + $0x18] sm:$0xf]
      %v214 = vld [vmem:[%s1 + $0x1c] sm:$0xf]
      %v215 = vld [vmem:[%s2] sm:$0x1]
      %v216 = vpack.c.bf16 %v176, %v175
      %v217 = vpack.c.bf16 %v178, %v177
      %v218 = vpack.c.bf16 %v180, %v179
      %v219 = vpack.c.bf16 %v182, %v181
      %v220 = vpack.c.bf16 %v184, %v183
      %v221 = vpack.c.bf16 %v186, %v185
      %v222 = vpack.c.bf16 %v188, %v187
      %v223 = vpack.c.bf16 %v190, %v189
      %v224 = vpack.c.bf16 %v192, %v191
      %v225 = vpack.c.bf16 %v194, %v193
      %v226 = vpack.c.bf16 %v196, %v195
      %v227 = vpack.c.bf16 %v198, %v197
      %v228 = vpack.c.bf16 %v200, %v199
      %v229 = vpack.c.bf16 %v202, %v201
      %v230 = vpack.c.bf16 %v204, %v203
      %v231 = vpack.c.bf16 %v206, %v205
      %v233 = vlaneseq
      %v234 = vshrl.u32 %v233, 7
      %v235 = vsub.s32 0, %v234
      %v236 = vrot.slane %v215, %v235
      %v246 = vunpack.c.l.b16 %v207
      %v247 = vunpack.c.l.b16 %v208
      %v248 = vunpack.c.l.b16 %v209
      %v249 = vunpack.c.l.b16 %v210
      %v250 = vunpack.c.l.b16 %v211
      %v251 = vunpack.c.l.b16 %v212
      %v252 = vunpack.c.l.b16 %v213
      %v253 = vunpack.c.l.b16 %v214
      %v254 = vpack.c.b16 %v247, %v246
      %v255 = vpack.c.b16 %v249, %v248
      %v256 = vpack.c.b16 %v251, %v250
      %v257 = vpack.c.b16 %v253, %v252
      %vm262 = vcmask 523264
      %v264 = vsel %vm262, %v216, 0
      %v267 = vsel %vm262, %v217, 0
      %v270 = vsel %vm262, %v218, 0
      %v273 = vsel %vm262, %v219, 0
      %v276 = vsel %vm262, %v220, 0
      %v279 = vsel %vm262, %v221, 0
      %v282 = vsel %vm262, %v222, 0
      %v285 = vsel %vm262, %v223, 0
      %v288 = vsel %vm262, %v224, 0
      %v291 = vsel %vm262, %v225, 0
      %v294 = vsel %vm262, %v226, 0
      %v297 = vsel %vm262, %v227, 0
      %v300 = vsel %vm262, %v228, 0
      %v303 = vsel %vm262, %v229, 0
      %v306 = vsel %vm262, %v230, 0
      %v309 = vsel %vm262, %v231, 0
      %311 = vmatprep.subr.bf16.mxu0 0
      %312 = vmatpush1.bf16.msra.mxu0 %v254
      %313 = vmatprep.subr.bf16.mxu0 0
      %314 = vmatpush1.bf16.msra.mxu0 %v255
      %315 = vmatprep.subr.bf16.mxu0 0
      %316 = vmatpush1.bf16.msra.mxu0 %v256
      %317 = vmatprep.subr.bf16.mxu0 0
      %318 = vmatpush1.bf16.msra.mxu0 %v257
      %319 = vmatprep.subr.bf16.mxu0 0
      %320 = vmatpush1.bf16.msra.mxu0 0
      %321 = vmatprep.subr.bf16.mxu0 0
      %322 = vmatpush1.bf16.msra.mxu0 0
      %323 = vmatprep.subr.bf16.mxu0 0
      %324 = vmatpush1.bf16.msra.mxu0 0
      %325 = vmatprep.subr.bf16.mxu0 0
      %326 = vmatpush1.bf16.msra.mxu0 0
      %327 = vmatprep.subr.bf16.mxu0 0
      %328 = vmatpush1.bf16.msra.mxu0 0
      %329 = vmatprep.subr.bf16.mxu0 0
      %330 = vmatpush1.bf16.msra.mxu0 0
      %331 = vmatprep.subr.bf16.mxu0 0
      %332 = vmatpush1.bf16.msra.mxu0 0
      %333 = vmatprep.subr.bf16.mxu0 0
      %334 = vmatpush1.bf16.msra.mxu0 0
      %335 = vmatprep.subr.bf16.mxu0 0
      %336 = vmatpush1.bf16.msra.mxu0 0
      %337 = vmatprep.subr.bf16.mxu0 0
      %338 = vmatpush1.bf16.msra.mxu0 0
      %339 = vmatprep.subr.bf16.mxu0 0
      %340 = vmatpush1.bf16.msra.mxu0 0
      %341 = vmatprep.subr.bf16.mxu0 0
      %342 = vmatpush1.bf16.msra.mxu0 0
      %343 = vmatprep.mubr.bf16.mxu0 0
      %344 = vmatmul.mubr.bf16.gmra.mrb[0].mxu0 %v264
      %v345 = vpop.f32.mrb[0].mxu0
      %v346 = vadd.f32 %v236, %v345
      %v347 = vpop.f32.mrb[0].mxu0
      %v348 = vpop.f32.mrb[0].mxu0
      %v349 = vadd.f32 %v236, %v348
      %v350 = vpop.f32.mrb[0].mxu0
      %351 = vmatprep.mubr.bf16.mxu0 0
      %352 = vmatmul.mubr.bf16.gmra.mrb[0].mxu0 %v267
      %v353 = vpop.f32.mrb[0].mxu0
      %v354 = vadd.f32 %v236, %v353
      %v355 = vpop.f32.mrb[0].mxu0
      %v356 = vpop.f32.mrb[0].mxu0
      %v357 = vadd.f32 %v236, %v356
      %v358 = vpop.f32.mrb[0].mxu0
      %359 = vmatprep.mubr.bf16.mxu0 0
      %360 = vmatmul.mubr.bf16.gmra.mrb[0].mxu0 %v270
      %v361 = vpop.f32.mrb[0].mxu0
      %v362 = vadd.f32 %v236, %v361
      %v363 = vpop.f32.mrb[0].mxu0
      %v364 = vpop.f32.mrb[0].mxu0
      %v365 = vadd.f32 %v236, %v364
      %v366 = vpop.f32.mrb[0].mxu0
      %367 = vmatprep.mubr.bf16.mxu0 0
      %368 = vmatmul.mubr.bf16.gmra.mrb[0].mxu0 %v273
      %v369 = vpop.f32.mrb[0].mxu0
      %v370 = vadd.f32 %v236, %v369
      %v371 = vpop.f32.mrb[0].mxu0
      %v372 = vpop.f32.mrb[0].mxu0
      %v373 = vadd.f32 %v236, %v372
      %v374 = vpop.f32.mrb[0].mxu0
      %375 = vmatprep.mubr.bf16.mxu0 0
      %376 = vmatmul.mubr.bf16.gmra.mrb[0].mxu0 %v276
      %v377 = vpop.f32.mrb[0].mxu0
      %v378 = vadd.f32 %v236, %v377
      %v379 = vpop.f32.mrb[0].mxu0
      %v380 = vpop.f32.mrb[0].mxu0
      %v381 = vadd.f32 %v236, %v380
      %v382 = vpop.f32.mrb[0].mxu0
      %383 = vmatprep.mubr.bf16.mxu0 0
      %384 = vmatmul.mubr.bf16.gmra.mrb[0].mxu0 %v279
      %v385 = vpop.f32.mrb[0].mxu0
      %v386 = vadd.f32 %v236, %v385
      %v387 = vpop.f32.mrb[0].mxu0
      %v388 = vpop.f32.mrb[0].mxu0
      %v389 = vadd.f32 %v236, %v388
      %v390 = vpop.f32.mrb[0].mxu0
      %391 = vmatprep.mubr.bf16.mxu0 0
      %392 = vmatmul.mubr.bf16.gmra.mrb[0].mxu0 %v282
      %v393 = vpop.f32.mrb[0].mxu0
      %v394 = vadd.f32 %v236, %v393
      %v395 = vpop.f32.mrb[0].mxu0
      %v396 = vpop.f32.mrb[0].mxu0
      %v397 = vadd.f32 %v236, %v396
      %v398 = vpop.f32.mrb[0].mxu0
      %399 = vmatprep.mubr.bf16.mxu0 0
      %400 = vmatmul.mubr.bf16.gmra.mrb[0].mxu0 %v285
      %v401 = vpop.f32.mrb[0].mxu0
      %v402 = vadd.f32 %v236, %v401
      %v403 = vpop.f32.mrb[0].mxu0
      %v404 = vpop.f32.mrb[0].mxu0
      %v405 = vadd.f32 %v236, %v404
      %v406 = vpop.f32.mrb[0].mxu0
      %407 = vmatprep.mubr.bf16.mxu0 0
      %408 = vmatmul.mubr.bf16.gmra.mrb[0].mxu0 %v288
      %v409 = vpop.f32.mrb[0].mxu0
      %v410 = vadd.f32 %v236, %v409
      %v411 = vpop.f32.mrb[0].mxu0
      %v412 = vpop.f32.mrb[0].mxu0
      %v413 = vadd.f32 %v236, %v412
      %v414 = vpop.f32.mrb[0].mxu0
      %415 = vmatprep.mubr.bf16.mxu0 0
      %416 = vmatmul.mubr.bf16.gmra.mrb[0].mxu0 %v291
      %v417 = vpop.f32.mrb[0].mxu0
      %v418 = vadd.f32 %v236, %v417
      %v419 = vpop.f32.mrb[0].mxu0
      %v420 = vpop.f32.mrb[0].mxu0
      %v421 = vadd.f32 %v236, %v420
      %v422 = vpop.f32.mrb[0].mxu0
      %423 = vmatprep.mubr.bf16.mxu0 0
      %424 = vmatmul.mubr.bf16.gmra.mrb[0].mxu0 %v294
      %v425 = vpop.f32.mrb[0].mxu0
      %v426 = vadd.f32 %v236, %v425
      %v427 = vpop.f32.mrb[0].mxu0
      %v428 = vpop.f32.mrb[0].mxu0
      %v429 = vadd.f32 %v236, %v428
      %v430 = vpop.f32.mrb[0].mxu0
      %431 = vmatprep.mubr.bf16.mxu0 0
      %432 = vmatmul.mubr.bf16.gmra.mrb[0].mxu0 %v297
      %v433 = vpop.f32.mrb[0].mxu0
      %v434 = vadd.f32 %v236, %v433
      %v435 = vpop.f32.mrb[0].mxu0
      %v436 = vpop.f32.mrb[0].mxu0
      %v437 = vadd.f32 %v236, %v436
      %v438 = vpop.f32.mrb[0].mxu0
      %439 = vmatprep.mubr.bf16.mxu0 0
      %440 = vmatmul.mubr.bf16.gmra.mrb[0].mxu0 %v300
      %v441 = vpop.f32.mrb[0].mxu0
      %v442 = vadd.f32 %v236, %v441
      %v443 = vpop.f32.mrb[0].mxu0
      %v444 = vpop.f32.mrb[0].mxu0
      %v445 = vadd.f32 %v236, %v444
      %v446 = vpop.f32.mrb[0].mxu0
      %447 = vmatprep.mubr.bf16.mxu0 0
      %448 = vmatmul.mubr.bf16.gmra.mrb[0].mxu0 %v303
      %v449 = vpop.f32.mrb[0].mxu0
      %v450 = vadd.f32 %v236, %v449
      %v451 = vpop.f32.mrb[0].mxu0
      %v452 = vpop.f32.mrb[0].mxu0
      %v453 = vadd.f32 %v236, %v452
      %v454 = vpop.f32.mrb[0].mxu0
      %455 = vmatprep.mubr.bf16.mxu0 0
      %456 = vmatmul.mubr.bf16.gmra.mrb[0].mxu0 %v306
      %v457 = vpop.f32.mrb[0].mxu0
      %v458 = vadd.f32 %v236, %v457
      %v459 = vpop.f32.mrb[0].mxu0
      %v460 = vpop.f32.mrb[0].mxu0
      %v461 = vadd.f32 %v236, %v460
      %v462 = vpop.f32.mrb[0].mxu0
      %463 = vmatprep.mubr.bf16.mxu0 0
      %464 = vmatmul.mubr.bf16.gmra.mrb[0].mxu0 %v309
      %v465 = vpop.f32.mrb[0].mxu0
      %v466 = vadd.f32 %v236, %v465
      %v467 = vpop.f32.mrb[0].mxu0
      %v468 = vpop.f32.mrb[0].mxu0
      %v469 = vadd.f32 %v236, %v468
      %v470 = vpop.f32.mrb[0].mxu0
      %471 = vdwg.mxu0
      %v472 = vtanh.pop %v346
      %v473 = vtanh.pop %v349
      %v474 = vtanh.pop %v354
      %v475 = vtanh.pop %v357
      %v476 = vtanh.pop %v362
      %v477 = vtanh.pop %v365
      %v478 = vtanh.pop %v370
      %v479 = vtanh.pop %v373
      %v480 = vtanh.pop %v378
      %v481 = vtanh.pop %v381
      %v482 = vtanh.pop %v386
      %v483 = vtanh.pop %v389
      %v484 = vtanh.pop %v394
      %v485 = vtanh.pop %v397
      %v486 = vtanh.pop %v402
      %v487 = vtanh.pop %v405
      %v488 = vtanh.pop %v410
      %v489 = vtanh.pop %v413
      %v490 = vtanh.pop %v418
      %v491 = vtanh.pop %v421
      %v492 = vtanh.pop %v426
      %v493 = vtanh.pop %v429
      %v494 = vtanh.pop %v434
      %v495 = vtanh.pop %v437
      %v496 = vtanh.pop %v442
      %v497 = vtanh.pop %v445
      %v498 = vtanh.pop %v450
      %v499 = vtanh.pop %v453
      %v500 = vtanh.pop %v458
      %v501 = vtanh.pop %v461
      %v502 = vtanh.pop %v466
      %v503 = vtanh.pop %v469
      %s504 = scalar_lea.vmem %s1, 32
      %v505 = vld [vmem:[%s504] sm:$0xf]
      %v506 = vld [vmem:[%s504 + $0x4] sm:$0xf]
      %v507 = vld [vmem:[%s504 + $0x8] sm:$0xf]
      %v508 = vld [vmem:[%s504 + $0xc] sm:$0xf]
      %v509 = vld [vmem:[%s504 + $0x10] sm:$0xf]
      %v510 = vld [vmem:[%s504 + $0x14] sm:$0xf]
      %v511 = vld [vmem:[%s504 + $0x18] sm:$0xf]
      %v512 = vld [vmem:[%s504 + $0x1c] sm:$0xf]
      %s513 = scalar_lea.vmem %s2, 1
      %v514 = vld [vmem:[%s513] sm:$0x1]
      %v515 = vpack.c.bf16 %v473, %v472
      %v516 = vpack.c.bf16 %v475, %v474
      %v517 = vpack.c.bf16 %v477, %v476
      %v518 = vpack.c.bf16 %v479, %v478
      %v519 = vpack.c.bf16 %v481, %v480
      %v520 = vpack.c.bf16 %v483, %v482
      %v521 = vpack.c.bf16 %v485, %v484
      %v522 = vpack.c.bf16 %v487, %v486
      %v523 = vpack.c.bf16 %v489, %v488
      %v524 = vpack.c.bf16 %v491, %v490
      %v525 = vpack.c.bf16 %v493, %v492
      %v526 = vpack.c.bf16 %v495, %v494
      %v527 = vpack.c.bf16 %v497, %v496
      %v528 = vpack.c.bf16 %v499, %v498
      %v529 = vpack.c.bf16 %v501, %v500
      %v530 = vpack.c.bf16 %v503, %v502
      %v532 = vlaneseq
      %v533 = vshrl.u32 %v532, 7
      %v534 = vsub.s32 0, %v533
      %v535 = vrot.slane %v514, %v534
      %v545 = vunpack.c.l.b16 %v505
      %v546 = vunpack.c.l.b16 %v506
      %v547 = vunpack.c.l.b16 %v507
      %v548 = vunpack.c.l.b16 %v508
      %v549 = vunpack.c.l.b16 %v509
      %v550 = vunpack.c.l.b16 %v510
      %v551 = vunpack.c.l.b16 %v511
      %v552 = vunpack.c.l.b16 %v512
      %v553 = vpack.c.b16 %v546, %v545
      %v554 = vpack.c.b16 %v548, %v547
      %v555 = vpack.c.b16 %v550, %v549
      %v556 = vpack.c.b16 %v552, %v551
      %v562 = vsel %vm262, %v515, 0
      %v565 = vsel %vm262, %v516, 0
      %v568 = vsel %vm262, %v517, 0
      %v571 = vsel %vm262, %v518, 0
      %v574 = vsel %vm262, %v519, 0
      %v577 = vsel %vm262, %v520, 0
      %v580 = vsel %vm262, %v521, 0
      %v583 = vsel %vm262, %v522, 0
      %v586 = vsel %vm262, %v523, 0
      %v589 = vsel %vm262, %v524, 0
      %v592 = vsel %vm262, %v525, 0
      %v595 = vsel %vm262, %v526, 0
      %v598 = vsel %vm262, %v527, 0
      %v601 = vsel %vm262, %v528, 0
      %v604 = vsel %vm262, %v529, 0
      %v607 = vsel %vm262, %v530, 0
      %609 = vmatprep.subr.bf16.mxu0 0
      %610 = vmatpush1.bf16.msra.mxu0 %v553
      %611 = vmatprep.subr.bf16.mxu0 0
      %612 = vmatpush1.bf16.msra.mxu0 %v554
      %613 = vmatprep.subr.bf16.mxu0 0
      %614 = vmatpush1.bf16.msra.mxu0 %v555
      %615 = vmatprep.subr.bf16.mxu0 0
      %616 = vmatpush1.bf16.msra.mxu0 %v556
      %617 = vmatprep.subr.bf16.mxu0 0
      %618 = vmatpush1.bf16.msra.mxu0 0
      %619 = vmatprep.subr.bf16.mxu0 0
      %620 = vmatpush1.bf16.msra.mxu0 0
      %621 = vmatprep.subr.bf16.mxu0 0
      %622 = vmatpush1.bf16.msra.mxu0 0
      %623 = vmatprep.subr.bf16.mxu0 0
      %624 = vmatpush1.bf16.msra.mxu0 0
      %625 = vmatprep.subr.bf16.mxu0 0
      %626 = vmatpush1.bf16.msra.mxu0 0
      %627 = vmatprep.subr.bf16.mxu0 0
      %628 = vmatpush1.bf16.msra.mxu0 0
      %629 = vmatprep.subr.bf16.mxu0 0
      %630 = vmatpush1.bf16.msra.mxu0 0
      %631 = vmatprep.subr.bf16.mxu0 0
      %632 = vmatpush1.bf16.msra.mxu0 0
      %633 = vmatprep.subr.bf16.mxu0 0
      %634 = vmatpush1.bf16.msra.mxu0 0
      %635 = vmatprep.subr.bf16.mxu0 0
      %636 = vmatpush1.bf16.msra.mxu0 0
      %637 = vmatprep.subr.bf16.mxu0 0
      %638 = vmatpush1.bf16.msra.mxu0 0
      %639 = vmatprep.subr.bf16.mxu0 0
      %640 = vmatpush1.bf16.msra.mxu0 0
      %641 = vmatprep.mubr.bf16.mxu0 0
      %642 = vmatmul.mubr.bf16.gmra.mrb[0].mxu0 %v562
      %v643 = vpop.f32.mrb[0].mxu0
      %v644 = vadd.f32 %v535, %v643
      %v645 = vpop.f32.mrb[0].mxu0
      %v646 = vpop.f32.mrb[0].mxu0
      %v647 = vadd.f32 %v535, %v646
      %v648 = vpop.f32.mrb[0].mxu0
      %649 = vmatprep.mubr.bf16.mxu0 0
      %650 = vmatmul.mubr.bf16.gmra.mrb[0].mxu0 %v565
      %v651 = vpop.f32.mrb[0].mxu0
      %v652 = vadd.f32 %v535, %v651
      %v653 = vpop.f32.mrb[0].mxu0
      %v654 = vpop.f32.mrb[0].mxu0
      %v655 = vadd.f32 %v535, %v654
      %v656 = vpop.f32.mrb[0].mxu0
      %657 = vmatprep.mubr.bf16.mxu0 0
      %658 = vmatmul.mubr.bf16.gmra.mrb[0].mxu0 %v568
      %v659 = vpop.f32.mrb[0].mxu0
      %v660 = vadd.f32 %v535, %v659
      %v661 = vpop.f32.mrb[0].mxu0
      %v662 = vpop.f32.mrb[0].mxu0
      %v663 = vadd.f32 %v535, %v662
      %v664 = vpop.f32.mrb[0].mxu0
      %665 = vmatprep.mubr.bf16.mxu0 0
      %666 = vmatmul.mubr.bf16.gmra.mrb[0].mxu0 %v571
      %v667 = vpop.f32.mrb[0].mxu0
      %v668 = vadd.f32 %v535, %v667
      %v669 = vpop.f32.mrb[0].mxu0
      %v670 = vpop.f32.mrb[0].mxu0
      %v671 = vadd.f32 %v535, %v670
      %v672 = vpop.f32.mrb[0].mxu0
      %673 = vmatprep.mubr.bf16.mxu0 0
      %674 = vmatmul.mubr.bf16.gmra.mrb[0].mxu0 %v574
      %v675 = vpop.f32.mrb[0].mxu0
      %v676 = vadd.f32 %v535, %v675
      %v677 = vpop.f32.mrb[0].mxu0
      %v678 = vpop.f32.mrb[0].mxu0
      %v679 = vadd.f32 %v535, %v678
      %v680 = vpop.f32.mrb[0].mxu0
      %681 = vmatprep.mubr.bf16.mxu0 0
      %682 = vmatmul.mubr.bf16.gmra.mrb[0].mxu0 %v577
      %v683 = vpop.f32.mrb[0].mxu0
      %v684 = vadd.f32 %v535, %v683
      %v685 = vpop.f32.mrb[0].mxu0
      %v686 = vpop.f32.mrb[0].mxu0
      %v687 = vadd.f32 %v535, %v686
      %v688 = vpop.f32.mrb[0].mxu0
      %689 = vmatprep.mubr.bf16.mxu0 0
      %690 = vmatmul.mubr.bf16.gmra.mrb[0].mxu0 %v580
      %v691 = vpop.f32.mrb[0].mxu0
      %v692 = vadd.f32 %v535, %v691
      %v693 = vpop.f32.mrb[0].mxu0
      %v694 = vpop.f32.mrb[0].mxu0
      %v695 = vadd.f32 %v535, %v694
      %v696 = vpop.f32.mrb[0].mxu0
      %697 = vmatprep.mubr.bf16.mxu0 0
      %698 = vmatmul.mubr.bf16.gmra.mrb[0].mxu0 %v583
      %v699 = vpop.f32.mrb[0].mxu0
      %v700 = vadd.f32 %v535, %v699
      %v701 = vpop.f32.mrb[0].mxu0
      %v702 = vpop.f32.mrb[0].mxu0
      %v703 = vadd.f32 %v535, %v702
      %v704 = vpop.f32.mrb[0].mxu0
      %705 = vmatprep.mubr.bf16.mxu0 0
      %706 = vmatmul.mubr.bf16.gmra.mrb[0].mxu0 %v586
      %v707 = vpop.f32.mrb[0].mxu0
      %v708 = vadd.f32 %v535, %v707
      %v709 = vpop.f32.mrb[0].mxu0
      %v710 = vpop.f32.mrb[0].mxu0
      %v711 = vadd.f32 %v535, %v710
      %v712 = vpop.f32.mrb[0].mxu0
      %713 = vmatprep.mubr.bf16.mxu0 0
      %714 = vmatmul.mubr.bf16.gmra.mrb[0].mxu0 %v589
      %v715 = vpop.f32.mrb[0].mxu0
      %v716 = vadd.f32 %v535, %v715
      %v717 = vpop.f32.mrb[0].mxu0
      %v718 = vpop.f32.mrb[0].mxu0
      %v719 = vadd.f32 %v535, %v718
      %v720 = vpop.f32.mrb[0].mxu0
      %721 = vmatprep.mubr.bf16.mxu0 0
      %722 = vmatmul.mubr.bf16.gmra.mrb[0].mxu0 %v592
      %v723 = vpop.f32.mrb[0].mxu0
      %v724 = vadd.f32 %v535, %v723
      %v725 = vpop.f32.mrb[0].mxu0
      %v726 = vpop.f32.mrb[0].mxu0
      %v727 = vadd.f32 %v535, %v726
      %v728 = vpop.f32.mrb[0].mxu0
      %729 = vmatprep.mubr.bf16.mxu0 0
      %730 = vmatmul.mubr.bf16.gmra.mrb[0].mxu0 %v595
      %v731 = vpop.f32.mrb[0].mxu0
      %v732 = vadd.f32 %v535, %v731
      %v733 = vpop.f32.mrb[0].mxu0
      %v734 = vpop.f32.mrb[0].mxu0
      %v735 = vadd.f32 %v535, %v734
      %v736 = vpop.f32.mrb[0].mxu0
      %737 = vmatprep.mubr.bf16.mxu0 0
      %738 = vmatmul.mubr.bf16.gmra.mrb[0].mxu0 %v598
      %v739 = vpop.f32.mrb[0].mxu0
      %v740 = vadd.f32 %v535, %v739
      %v741 = vpop.f32.mrb[0].mxu0
      %v742 = vpop.f32.mrb[0].mxu0
      %v743 = vadd.f32 %v535, %v742
      %v744 = vpop.f32.mrb[0].mxu0
      %745 = vmatprep.mubr.bf16.mxu0 0
      %746 = vmatmul.mubr.bf16.gmra.mrb[0].mxu0 %v601
      %v747 = vpop.f32.mrb[0].mxu0
      %v748 = vadd.f32 %v535, %v747
      %v749 = vpop.f32.mrb[0].mxu0
      %v750 = vpop.f32.mrb[0].mxu0
      %v751 = vadd.f32 %v535, %v750
      %v752 = vpop.f32.mrb[0].mxu0
      %753 = vmatprep.mubr.bf16.mxu0 0
      %754 = vmatmul.mubr.bf16.gmra.mrb[0].mxu0 %v604
      %v755 = vpop.f32.mrb[0].mxu0
      %v756 = vadd.f32 %v535, %v755
      %v757 = vpop.f32.mrb[0].mxu0
      %v758 = vpop.f32.mrb[0].mxu0
      %v759 = vadd.f32 %v535, %v758
      %v760 = vpop.f32.mrb[0].mxu0
      %761 = vmatprep.mubr.bf16.mxu0 0
      %762 = vmatmul.mubr.bf16.gmra.mrb[0].mxu0 %v607
      %v763 = vpop.f32.mrb[0].mxu0
      %v764 = vadd.f32 %v535, %v763
      %v765 = vpop.f32.mrb[0].mxu0
      %v766 = vpop.f32.mrb[0].mxu0
      %v767 = vadd.f32 %v535, %v766
      %v768 = vpop.f32.mrb[0].mxu0
      %769 = vdwg.mxu0
      %v770 = vtanh.pop %v644
      %v771 = vtanh.pop %v647
      %v772 = vtanh.pop %v652
      %v773 = vtanh.pop %v655
      %v774 = vtanh.pop %v660
      %v775 = vtanh.pop %v663
      %v776 = vtanh.pop %v668
      %v777 = vtanh.pop %v671
      %v778 = vtanh.pop %v676
      %v779 = vtanh.pop %v679
      %v780 = vtanh.pop %v684
      %v781 = vtanh.pop %v687
      %v782 = vtanh.pop %v692
      %v783 = vtanh.pop %v695
      %v784 = vtanh.pop %v700
      %v785 = vtanh.pop %v703
      %v786 = vtanh.pop %v708
      %v787 = vtanh.pop %v711
      %v788 = vtanh.pop %v716
      %v789 = vtanh.pop %v719
      %v790 = vtanh.pop %v724
      %v791 = vtanh.pop %v727
      %v792 = vtanh.pop %v732
      %v793 = vtanh.pop %v735
      %v794 = vtanh.pop %v740
      %v795 = vtanh.pop %v743
      %v796 = vtanh.pop %v748
      %v797 = vtanh.pop %v751
      %v798 = vtanh.pop %v756
      %v799 = vtanh.pop %v759
      %v800 = vtanh.pop %v764
      %v801 = vtanh.pop %v767
      %s802 = scalar_lea.vmem %s1, 64
      %v803 = vld [vmem:[%s802] sm:$0xf]
      %v804 = vld [vmem:[%s802 + $0x4] sm:$0xf]
      %v805 = vld [vmem:[%s802 + $0x8] sm:$0xf]
      %v806 = vld [vmem:[%s802 + $0xc] sm:$0xf]
      %v807 = vld [vmem:[%s802 + $0x10] sm:$0xf]
      %v808 = vld [vmem:[%s802 + $0x14] sm:$0xf]
      %v809 = vld [vmem:[%s802 + $0x18] sm:$0xf]
      %v810 = vld [vmem:[%s802 + $0x1c] sm:$0xf]
      %s811 = scalar_lea.vmem %s2, 2
      %v812 = vld [vmem:[%s811] sm:$0x1]
      %v813 = vpack.c.bf16 %v771, %v770
      %v814 = vpack.c.bf16 %v773, %v772
      %v815 = vpack.c.bf16 %v775, %v774
      %v816 = vpack.c.bf16 %v777, %v776
      %v817 = vpack.c.bf16 %v779, %v778
      %v818 = vpack.c.bf16 %v781, %v780
      %v819 = vpack.c.bf16 %v783, %v782
      %v820 = vpack.c.bf16 %v785, %v784
      %v821 = vpack.c.bf16 %v787, %v786
      %v822 = vpack.c.bf16 %v789, %v788
      %v823 = vpack.c.bf16 %v791, %v790
      %v824 = vpack.c.bf16 %v793, %v792
      %v825 = vpack.c.bf16 %v795, %v794
      %v826 = vpack.c.bf16 %v797, %v796
      %v827 = vpack.c.bf16 %v799, %v798
      %v828 = vpack.c.bf16 %v801, %v800
      %v830 = vlaneseq
      %v831 = vshrl.u32 %v830, 7
      %v832 = vsub.s32 0, %v831
      %v833 = vrot.slane %v812, %v832
      %v843 = vunpack.c.l.b16 %v803
      %v844 = vunpack.c.l.b16 %v804
      %v845 = vunpack.c.l.b16 %v805
      %v846 = vunpack.c.l.b16 %v806
      %v847 = vunpack.c.l.b16 %v807
      %v848 = vunpack.c.l.b16 %v808
      %v849 = vunpack.c.l.b16 %v809
      %v850 = vunpack.c.l.b16 %v810
      %v851 = vpack.c.b16 %v844, %v843
      %v852 = vpack.c.b16 %v846, %v845
      %v853 = vpack.c.b16 %v848, %v847
      %v854 = vpack.c.b16 %v850, %v849
      %v860 = vsel %vm262, %v813, 0
      %v863 = vsel %vm262, %v814, 0
      %v866 = vsel %vm262, %v815, 0
      %v869 = vsel %vm262, %v816, 0
      %v872 = vsel %vm262, %v817, 0
      %v875 = vsel %vm262, %v818, 0
      %v878 = vsel %vm262, %v819, 0
      %v881 = vsel %vm262, %v820, 0
      %v884 = vsel %vm262, %v821, 0
      %v887 = vsel %vm262, %v822, 0
      %v890 = vsel %vm262, %v823, 0
      %v893 = vsel %vm262, %v824, 0
      %v896 = vsel %vm262, %v825, 0
      %v899 = vsel %vm262, %v826, 0
      %v902 = vsel %vm262, %v827, 0
      %v905 = vsel %vm262, %v828, 0
      %907 = vmatprep.subr.bf16.mxu0 0
      %908 = vmatpush1.bf16.msra.mxu0 %v851
      %909 = vmatprep.subr.bf16.mxu0 0
      %910 = vmatpush1.bf16.msra.mxu0 %v852
      %911 = vmatprep.subr.bf16.mxu0 0
      %912 = vmatpush1.bf16.msra.mxu0 %v853
      %913 = vmatprep.subr.bf16.mxu0 0
      %914 = vmatpush1.bf16.msra.mxu0 %v854
      %915 = vmatprep.subr.bf16.mxu0 0
      %916 = vmatpush1.bf16.msra.mxu0 0
      %917 = vmatprep.subr.bf16.mxu0 0
      %918 = vmatpush1.bf16.msra.mxu0 0
      %919 = vmatprep.subr.bf16.mxu0 0
      %920 = vmatpush1.bf16.msra.mxu0 0
      %921 = vmatprep.subr.bf16.mxu0 0
      %922 = vmatpush1.bf16.msra.mxu0 0
      %923 = vmatprep.subr.bf16.mxu0 0
      %924 = vmatpush1.bf16.msra.mxu0 0
      %925 = vmatprep.subr.bf16.mxu0 0
      %926 = vmatpush1.bf16.msra.mxu0 0
      %927 = vmatprep.subr.bf16.mxu0 0
      %928 = vmatpush1.bf16.msra.mxu0 0
      %929 = vmatprep.subr.bf16.mxu0 0
      %930 = vmatpush1.bf16.msra.mxu0 0
      %931 = vmatprep.subr.bf16.mxu0 0
      %932 = vmatpush1.bf16.msra.mxu0 0
      %933 = vmatprep.subr.bf16.mxu0 0
      %934 = vmatpush1.bf16.msra.mxu0 0
      %935 = vmatprep.subr.bf16.mxu0 0
      %936 = vmatpush1.bf16.msra.mxu0 0
      %937 = vmatprep.subr.bf16.mxu0 0
      %938 = vmatpush1.bf16.msra.mxu0 0
      %939 = vmatprep.mubr.bf16.mxu0 0
      %940 = vmatmul.mubr.bf16.gmra.mrb[0].mxu0 %v860
      %v941 = vpop.f32.mrb[0].mxu0
      %v942 = vadd.f32 %v833, %v941
      %v943 = vpop.f32.mrb[0].mxu0
      %v944 = vpop.f32.mrb[0].mxu0
      %v945 = vadd.f32 %v833, %v944
      %v946 = vpop.f32.mrb[0].mxu0
      %947 = vmatprep.mubr.bf16.mxu0 0
      %948 = vmatmul.mubr.bf16.gmra.mrb[0].mxu0 %v863
      %v949 = vpop.f32.mrb[0].mxu0
      %v950 = vadd.f32 %v833, %v949
      %v951 = vpop.f32.mrb[0].mxu0
      %v952 = vpop.f32.mrb[0].mxu0
      %v953 = vadd.f32 %v833, %v952
      %v954 = vpop.f32.mrb[0].mxu0
      %955 = vmatprep.mubr.bf16.mxu0 0
      %956 = vmatmul.mubr.bf16.gmra.mrb[0].mxu0 %v866
      %v957 = vpop.f32.mrb[0].mxu0
      %v958 = vadd.f32 %v833, %v957
      %v959 = vpop.f32.mrb[0].mxu0
      %v960 = vpop.f32.mrb[0].mxu0
      %v961 = vadd.f32 %v833, %v960
      %v962 = vpop.f32.mrb[0].mxu0
      %963 = vmatprep.mubr.bf16.mxu0 0
      %964 = vmatmul.mubr.bf16.gmra.mrb[0].mxu0 %v869
      %v965 = vpop.f32.mrb[0].mxu0
      %v966 = vadd.f32 %v833, %v965
      %v967 = vpop.f32.mrb[0].mxu0
      %v968 = vpop.f32.mrb[0].mxu0
      %v969 = vadd.f32 %v833, %v968
      %v970 = vpop.f32.mrb[0].mxu0
      %971 = vmatprep.mubr.bf16.mxu0 0
      %972 = vmatmul.mubr.bf16.gmra.mrb[0].mxu0 %v872
      %v973 = vpop.f32.mrb[0].mxu0
      %v974 = vadd.f32 %v833, %v973
      %v975 = vpop.f32.mrb[0].mxu0
      %v976 = vpop.f32.mrb[0].mxu0
      %v977 = vadd.f32 %v833, %v976
      %v978 = vpop.f32.mrb[0].mxu0
      %979 = vmatprep.mubr.bf16.mxu0 0
      %980 = vmatmul.mubr.bf16.gmra.mrb[0].mxu0 %v875
      %v981 = vpop.f32.mrb[0].mxu0
      %v982 = vadd.f32 %v833, %v981
      %v983 = vpop.f32.mrb[0].mxu0
      %v984 = vpop.f32.mrb[0].mxu0
      %v985 = vadd.f32 %v833, %v984
      %v986 = vpop.f32.mrb[0].mxu0
      %987 = vmatprep.mubr.bf16.mxu0 0
      %988 = vmatmul.mubr.bf16.gmra.mrb[0].mxu0 %v878
      %v989 = vpop.f32.mrb[0].mxu0
      %v990 = vadd.f32 %v833, %v989
      %v991 = vpop.f32.mrb[0].mxu0
      %v992 = vpop.f32.mrb[0].mxu0
      %v993 = vadd.f32 %v833, %v992
      %v994 = vpop.f32.mrb[0].mxu0
      %995 = vmatprep.mubr.bf16.mxu0 0
      %996 = vmatmul.mubr.bf16.gmra.mrb[0].mxu0 %v881
      %v997 = vpop.f32.mrb[0].mxu0
      %v998 = vadd.f32 %v833, %v997
      %v999 = vpop.f32.mrb[0].mxu0
      %v1000 = vpop.f32.mrb[0].mxu0
      %v1001 = vadd.f32 %v833, %v1000
      %v1002 = vpop.f32.mrb[0].mxu0
      %1003 = vmatprep.mubr.bf16.mxu0 0
      %1004 = vmatmul.mubr.bf16.gmra.mrb[0].mxu0 %v884
      %v1005 = vpop.f32.mrb[0].mxu0
      %v1006 = vadd.f32 %v833, %v1005
      %v1007 = vpop.f32.mrb[0].mxu0
      %v1008 = vpop.f32.mrb[0].mxu0
      %v1009 = vadd.f32 %v833, %v1008
      %v1010 = vpop.f32.mrb[0].mxu0
      %1011 = vmatprep.mubr.bf16.mxu0 0
      %1012 = vmatmul.mubr.bf16.gmra.mrb[0].mxu0 %v887
      %v1013 = vpop.f32.mrb[0].mxu0
      %v1014 = vadd.f32 %v833, %v1013
      %v1015 = vpop.f32.mrb[0].mxu0
      %v1016 = vpop.f32.mrb[0].mxu0
      %v1017 = vadd.f32 %v833, %v1016
      %v1018 = vpop.f32.mrb[0].mxu0
      %1019 = vmatprep.mubr.bf16.mxu0 0
      %1020 = vmatmul.mubr.bf16.gmra.mrb[0].mxu0 %v890
      %v1021 = vpop.f32.mrb[0].mxu0
      %v1022 = vadd.f32 %v833, %v1021
      %v1023 = vpop.f32.mrb[0].mxu0
      %v1024 = vpop.f32.mrb[0].mxu0
      %v1025 = vadd.f32 %v833, %v1024
      %v1026 = vpop.f32.mrb[0].mxu0
      %1027 = vmatprep.mubr.bf16.mxu0 0
      %1028 = vmatmul.mubr.bf16.gmra.mrb[0].mxu0 %v893
      %v1029 = vpop.f32.mrb[0].mxu0
      %v1030 = vadd.f32 %v833, %v1029
      %v1031 = vpop.f32.mrb[0].mxu0
      %v1032 = vpop.f32.mrb[0].mxu0
      %v1033 = vadd.f32 %v833, %v1032
      %v1034 = vpop.f32.mrb[0].mxu0
      %1035 = vmatprep.mubr.bf16.mxu0 0
      %1036 = vmatmul.mubr.bf16.gmra.mrb[0].mxu0 %v896
      %v1037 = vpop.f32.mrb[0].mxu0
      %v1038 = vadd.f32 %v833, %v1037
      %v1039 = vpop.f32.mrb[0].mxu0
      %v1040 = vpop.f32.mrb[0].mxu0
      %v1041 = vadd.f32 %v833, %v1040
      %v1042 = vpop.f32.mrb[0].mxu0
      %1043 = vmatprep.mubr.bf16.mxu0 0
      %1044 = vmatmul.mubr.bf16.gmra.mrb[0].mxu0 %v899
      %v1045 = vpop.f32.mrb[0].mxu0
      %v1046 = vadd.f32 %v833, %v1045
      %v1047 = vpop.f32.mrb[0].mxu0
      %v1048 = vpop.f32.mrb[0].mxu0
      %v1049 = vadd.f32 %v833, %v1048
      %v1050 = vpop.f32.mrb[0].mxu0
      %1051 = vmatprep.mubr.bf16.mxu0 0
      %1052 = vmatmul.mubr.bf16.gmra.mrb[0].mxu0 %v902
      %v1053 = vpop.f32.mrb[0].mxu0
      %v1054 = vadd.f32 %v833, %v1053
      %v1055 = vpop.f32.mrb[0].mxu0
      %v1056 = vpop.f32.mrb[0].mxu0
      %v1057 = vadd.f32 %v833, %v1056
      %v1058 = vpop.f32.mrb[0].mxu0
      %1059 = vmatprep.mubr.bf16.mxu0 0
      %1060 = vmatmul.mubr.bf16.gmra.mrb[0].mxu0 %v905
      %v1061 = vpop.f32.mrb[0].mxu0
      %v1062 = vadd.f32 %v833, %v1061
      %v1063 = vpop.f32.mrb[0].mxu0
      %v1064 = vpop.f32.mrb[0].mxu0
      %v1065 = vadd.f32 %v833, %v1064
      %v1066 = vpop.f32.mrb[0].mxu0
      %1067 = vdwg.mxu0
      %v1068 = vtanh.pop %v942
      %v1069 = vtanh.pop %v945
      %v1070 = vtanh.pop %v950
      %v1071 = vtanh.pop %v953
      %v1072 = vtanh.pop %v958
      %v1073 = vtanh.pop %v961
      %v1074 = vtanh.pop %v966
      %v1075 = vtanh.pop %v969
      %v1076 = vtanh.pop %v974
      %v1077 = vtanh.pop %v977
      %v1078 = vtanh.pop %v982
      %v1079 = vtanh.pop %v985
      %v1080 = vtanh.pop %v990
      %v1081 = vtanh.pop %v993
      %v1082 = vtanh.pop %v998
      %v1083 = vtanh.pop %v1001
      %v1084 = vtanh.pop %v1006
      %v1085 = vtanh.pop %v1009
      %v1086 = vtanh.pop %v1014
      %v1087 = vtanh.pop %v1017
      %v1088 = vtanh.pop %v1022
      %v1089 = vtanh.pop %v1025
      %v1090 = vtanh.pop %v1030
      %v1091 = vtanh.pop %v1033
      %v1092 = vtanh.pop %v1038
      %v1093 = vtanh.pop %v1041
      %v1094 = vtanh.pop %v1046
      %v1095 = vtanh.pop %v1049
      %v1096 = vtanh.pop %v1054
      %v1097 = vtanh.pop %v1057
      %v1098 = vtanh.pop %v1062
      %v1099 = vtanh.pop %v1065
      %s1100 = scalar_lea.vmem %s1, 96
      %v1101 = vld [vmem:[%s1100] sm:$0xf]
      %v1102 = vld [vmem:[%s1100 + $0x4] sm:$0xf]
      %v1103 = vld [vmem:[%s1100 + $0x8] sm:$0xf]
      %v1104 = vld [vmem:[%s1100 + $0xc] sm:$0xf]
      %v1105 = vld [vmem:[%s1100 + $0x10] sm:$0xf]
      %v1106 = vld [vmem:[%s1100 + $0x14] sm:$0xf]
      %v1107 = vld [vmem:[%s1100 + $0x18] sm:$0xf]
      %v1108 = vld [vmem:[%s1100 + $0x1c] sm:$0xf]
      %s1109 = scalar_lea.vmem %s2, 3
      %v1110 = vld [vmem:[%s1109] sm:$0x1]
      %v1111 = vpack.c.bf16 %v1069, %v1068
      %v1112 = vpack.c.bf16 %v1071, %v1070
      %v1113 = vpack.c.bf16 %v1073, %v1072
      %v1114 = vpack.c.bf16 %v1075, %v1074
      %v1115 = vpack.c.bf16 %v1077, %v1076
      %v1116 = vpack.c.bf16 %v1079, %v1078
      %v1117 = vpack.c.bf16 %v1081, %v1080
      %v1118 = vpack.c.bf16 %v1083, %v1082
      %v1119 = vpack.c.bf16 %v1085, %v1084
      %v1120 = vpack.c.bf16 %v1087, %v1086
      %v1121 = vpack.c.bf16 %v1089, %v1088
      %v1122 = vpack.c.bf16 %v1091, %v1090
      %v1123 = vpack.c.bf16 %v1093, %v1092
      %v1124 = vpack.c.bf16 %v1095, %v1094
      %v1125 = vpack.c.bf16 %v1097, %v1096
      %v1126 = vpack.c.bf16 %v1099, %v1098
      %v1128 = vlaneseq
      %v1129 = vshrl.u32 %v1128, 7
      %v1130 = vsub.s32 0, %v1129
      %v1131 = vrot.slane %v1110, %v1130
      %v1141 = vunpack.c.l.b16 %v1101
      %v1142 = vunpack.c.l.b16 %v1102
      %v1143 = vunpack.c.l.b16 %v1103
      %v1144 = vunpack.c.l.b16 %v1104
      %v1145 = vunpack.c.l.b16 %v1105
      %v1146 = vunpack.c.l.b16 %v1106
      %v1147 = vunpack.c.l.b16 %v1107
      %v1148 = vunpack.c.l.b16 %v1108
      %v1149 = vpack.c.b16 %v1142, %v1141
      %v1150 = vpack.c.b16 %v1144, %v1143
      %v1151 = vpack.c.b16 %v1146, %v1145
      %v1152 = vpack.c.b16 %v1148, %v1147
      %v1158 = vsel %vm262, %v1111, 0
      %v1161 = vsel %vm262, %v1112, 0
      %v1164 = vsel %vm262, %v1113, 0
      %v1167 = vsel %vm262, %v1114, 0
      %v1170 = vsel %vm262, %v1115, 0
      %v1173 = vsel %vm262, %v1116, 0
      %v1176 = vsel %vm262, %v1117, 0
      %v1179 = vsel %vm262, %v1118, 0
      %v1182 = vsel %vm262, %v1119, 0
      %v1185 = vsel %vm262, %v1120, 0
      %v1188 = vsel %vm262, %v1121, 0
      %v1191 = vsel %vm262, %v1122, 0
      %v1194 = vsel %vm262, %v1123, 0
      %v1197 = vsel %vm262, %v1124, 0
      %v1200 = vsel %vm262, %v1125, 0
      %v1203 = vsel %vm262, %v1126, 0
      %1205 = vmatprep.subr.bf16.mxu0 0
      %1206 = vmatpush1.bf16.msra.mxu0 %v1149
      %1207 = vmatprep.subr.bf16.mxu0 0
      %1208 = vmatpush1.bf16.msra.mxu0 %v1150
      %1209 = vmatprep.subr.bf16.mxu0 0
      %1210 = vmatpush1.bf16.msra.mxu0 %v1151
      %1211 = vmatprep.subr.bf16.mxu0 0
      %1212 = vmatpush1.bf16.msra.mxu0 %v1152
      %1213 = vmatprep.subr.bf16.mxu0 0
      %1214 = vmatpush1.bf16.msra.mxu0 0
      %1215 = vmatprep.subr.bf16.mxu0 0
      %1216 = vmatpush1.bf16.msra.mxu0 0
      %1217 = vmatprep.subr.bf16.mxu0 0
      %1218 = vmatpush1.bf16.msra.mxu0 0
      %1219 = vmatprep.subr.bf16.mxu0 0
      %1220 = vmatpush1.bf16.msra.mxu0 0
      %1221 = vmatprep.subr.bf16.mxu0 0
      %1222 = vmatpush1.bf16.msra.mxu0 0
      %1223 = vmatprep.subr.bf16.mxu0 0
      %1224 = vmatpush1.bf16.msra.mxu0 0
      %1225 = vmatprep.subr.bf16.mxu0 0
      %1226 = vmatpush1.bf16.msra.mxu0 0
      %1227 = vmatprep.subr.bf16.mxu0 0
      %1228 = vmatpush1.bf16.msra.mxu0 0
      %1229 = vmatprep.subr.bf16.mxu0 0
      %1230 = vmatpush1.bf16.msra.mxu0 0
      %1231 = vmatprep.subr.bf16.mxu0 0
      %1232 = vmatpush1.bf16.msra.mxu0 0
      %1233 = vmatprep.subr.bf16.mxu0 0
      %1234 = vmatpush1.bf16.msra.mxu0 0
      %1235 = vmatprep.subr.bf16.mxu0 0
      %1236 = vmatpush1.bf16.msra.mxu0 0
      %1237 = vmatprep.mubr.bf16.mxu0 0
      %1238 = vmatmul.mubr.bf16.gmra.mrb[0].mxu0 %v1158
      %v1239 = vpop.f32.mrb[0].mxu0
      %v1240 = vadd.f32 %v1131, %v1239
      %v1241 = vpop.f32.mrb[0].mxu0
      %v1242 = vpop.f32.mrb[0].mxu0
      %v1243 = vadd.f32 %v1131, %v1242
      %v1244 = vpop.f32.mrb[0].mxu0
      %1245 = vmatprep.mubr.bf16.mxu0 0
      %1246 = vmatmul.mubr.bf16.gmra.mrb[0].mxu0 %v1161
      %v1247 = vpop.f32.mrb[0].mxu0
      %v1248 = vadd.f32 %v1131, %v1247
      %v1249 = vpop.f32.mrb[0].mxu0
      %v1250 = vpop.f32.mrb[0].mxu0
      %v1251 = vadd.f32 %v1131, %v1250
      %v1252 = vpop.f32.mrb[0].mxu0
      %1253 = vmatprep.mubr.bf16.mxu0 0
      %1254 = vmatmul.mubr.bf16.gmra.mrb[0].mxu0 %v1164
      %v1255 = vpop.f32.mrb[0].mxu0
      %v1256 = vadd.f32 %v1131, %v1255
      %v1257 = vpop.f32.mrb[0].mxu0
      %v1258 = vpop.f32.mrb[0].mxu0
      %v1259 = vadd.f32 %v1131, %v1258
      %v1260 = vpop.f32.mrb[0].mxu0
      %1261 = vmatprep.mubr.bf16.mxu0 0
      %1262 = vmatmul.mubr.bf16.gmra.mrb[0].mxu0 %v1167
      %v1263 = vpop.f32.mrb[0].mxu0
      %v1264 = vadd.f32 %v1131, %v1263
      %v1265 = vpop.f32.mrb[0].mxu0
      %v1266 = vpop.f32.mrb[0].mxu0
      %v1267 = vadd.f32 %v1131, %v1266
      %v1268 = vpop.f32.mrb[0].mxu0
      %1269 = vmatprep.mubr.bf16.mxu0 0
      %1270 = vmatmul.mubr.bf16.gmra.mrb[0].mxu0 %v1170
      %v1271 = vpop.f32.mrb[0].mxu0
      %v1272 = vadd.f32 %v1131, %v1271
      %v1273 = vpop.f32.mrb[0].mxu0
      %v1274 = vpop.f32.mrb[0].mxu0
      %v1275 = vadd.f32 %v1131, %v1274
      %v1276 = vpop.f32.mrb[0].mxu0
      %1277 = vmatprep.mubr.bf16.mxu0 0
      %1278 = vmatmul.mubr.bf16.gmra.mrb[0].mxu0 %v1173
      %v1279 = vpop.f32.mrb[0].mxu0
      %v1280 = vadd.f32 %v1131, %v1279
      %v1281 = vpop.f32.mrb[0].mxu0
      %v1282 = vpop.f32.mrb[0].mxu0
      %v1283 = vadd.f32 %v1131, %v1282
      %v1284 = vpop.f32.mrb[0].mxu0
      %1285 = vmatprep.mubr.bf16.mxu0 0
      %1286 = vmatmul.mubr.bf16.gmra.mrb[0].mxu0 %v1176
      %v1287 = vpop.f32.mrb[0].mxu0
      %v1288 = vadd.f32 %v1131, %v1287
      %v1289 = vpop.f32.mrb[0].mxu0
      %v1290 = vpop.f32.mrb[0].mxu0
      %v1291 = vadd.f32 %v1131, %v1290
      %v1292 = vpop.f32.mrb[0].mxu0
      %1293 = vmatprep.mubr.bf16.mxu0 0
      %1294 = vmatmul.mubr.bf16.gmra.mrb[0].mxu0 %v1179
      %v1295 = vpop.f32.mrb[0].mxu0
      %v1296 = vadd.f32 %v1131, %v1295
      %v1297 = vpop.f32.mrb[0].mxu0
      %v1298 = vpop.f32.mrb[0].mxu0
      %v1299 = vadd.f32 %v1131, %v1298
      %v1300 = vpop.f32.mrb[0].mxu0
      %1301 = vmatprep.mubr.bf16.mxu0 0
      %1302 = vmatmul.mubr.bf16.gmra.mrb[0].mxu0 %v1182
      %v1303 = vpop.f32.mrb[0].mxu0
      %v1304 = vadd.f32 %v1131, %v1303
      %v1305 = vpop.f32.mrb[0].mxu0
      %v1306 = vpop.f32.mrb[0].mxu0
      %v1307 = vadd.f32 %v1131, %v1306
      %v1308 = vpop.f32.mrb[0].mxu0
      %1309 = vmatprep.mubr.bf16.mxu0 0
      %1310 = vmatmul.mubr.bf16.gmra.mrb[0].mxu0 %v1185
      %v1311 = vpop.f32.mrb[0].mxu0
      %v1312 = vadd.f32 %v1131, %v1311
      %v1313 = vpop.f32.mrb[0].mxu0
      %v1314 = vpop.f32.mrb[0].mxu0
      %v1315 = vadd.f32 %v1131, %v1314
      %v1316 = vpop.f32.mrb[0].mxu0
      %1317 = vmatprep.mubr.bf16.mxu0 0
      %1318 = vmatmul.mubr.bf16.gmra.mrb[0].mxu0 %v1188
      %v1319 = vpop.f32.mrb[0].mxu0
      %v1320 = vadd.f32 %v1131, %v1319
      %v1321 = vpop.f32.mrb[0].mxu0
      %v1322 = vpop.f32.mrb[0].mxu0
      %v1323 = vadd.f32 %v1131, %v1322
      %v1324 = vpop.f32.mrb[0].mxu0
      %1325 = vmatprep.mubr.bf16.mxu0 0
      %1326 = vmatmul.mubr.bf16.gmra.mrb[0].mxu0 %v1191
      %v1327 = vpop.f32.mrb[0].mxu0
      %v1328 = vadd.f32 %v1131, %v1327
      %v1329 = vpop.f32.mrb[0].mxu0
      %v1330 = vpop.f32.mrb[0].mxu0
      %v1331 = vadd.f32 %v1131, %v1330
      %v1332 = vpop.f32.mrb[0].mxu0
      %1333 = vmatprep.mubr.bf16.mxu0 0
      %1334 = vmatmul.mubr.bf16.gmra.mrb[0].mxu0 %v1194
      %v1335 = vpop.f32.mrb[0].mxu0
      %v1336 = vadd.f32 %v1131, %v1335
      %v1337 = vpop.f32.mrb[0].mxu0
      %v1338 = vpop.f32.mrb[0].mxu0
      %v1339 = vadd.f32 %v1131, %v1338
      %v1340 = vpop.f32.mrb[0].mxu0
      %1341 = vmatprep.mubr.bf16.mxu0 0
      %1342 = vmatmul.mubr.bf16.gmra.mrb[0].mxu0 %v1197
      %v1343 = vpop.f32.mrb[0].mxu0
      %v1344 = vadd.f32 %v1131, %v1343
      %v1345 = vpop.f32.mrb[0].mxu0
      %v1346 = vpop.f32.mrb[0].mxu0
      %v1347 = vadd.f32 %v1131, %v1346
      %v1348 = vpop.f32.mrb[0].mxu0
      %1349 = vmatprep.mubr.bf16.mxu0 0
      %1350 = vmatmul.mubr.bf16.gmra.mrb[0].mxu0 %v1200
      %v1351 = vpop.f32.mrb[0].mxu0
      %v1352 = vadd.f32 %v1131, %v1351
      %v1353 = vpop.f32.mrb[0].mxu0
      %v1354 = vpop.f32.mrb[0].mxu0
      %v1355 = vadd.f32 %v1131, %v1354
      %v1356 = vpop.f32.mrb[0].mxu0
      %1357 = vmatprep.mubr.bf16.mxu0 0
      %1358 = vmatmul.mubr.bf16.gmra.mrb[0].mxu0 %v1203
      %v1359 = vpop.f32.mrb[0].mxu0
      %v1360 = vadd.f32 %v1131, %v1359
      %v1361 = vpop.f32.mrb[0].mxu0
      %v1362 = vpop.f32.mrb[0].mxu0
      %v1363 = vadd.f32 %v1131, %v1362
      %v1364 = vpop.f32.mrb[0].mxu0
      %1365 = vdwg.mxu0
      %v1366 = vtanh.pop %v1240
      %v1367 = vtanh.pop %v1243
      %v1368 = vtanh.pop %v1248
      %v1369 = vtanh.pop %v1251
      %v1370 = vtanh.pop %v1256
      %v1371 = vtanh.pop %v1259
      %v1372 = vtanh.pop %v1264
      %v1373 = vtanh.pop %v1267
      %v1374 = vtanh.pop %v1272
      %v1375 = vtanh.pop %v1275
      %v1376 = vtanh.pop %v1280
      %v1377 = vtanh.pop %v1283
      %v1378 = vtanh.pop %v1288
      %v1379 = vtanh.pop %v1291
      %v1380 = vtanh.pop %v1296
      %v1381 = vtanh.pop %v1299
      %v1382 = vtanh.pop %v1304
      %v1383 = vtanh.pop %v1307
      %v1384 = vtanh.pop %v1312
      %v1385 = vtanh.pop %v1315
      %v1386 = vtanh.pop %v1320
      %v1387 = vtanh.pop %v1323
      %v1388 = vtanh.pop %v1328
      %v1389 = vtanh.pop %v1331
      %v1390 = vtanh.pop %v1336
      %v1391 = vtanh.pop %v1339
      %v1392 = vtanh.pop %v1344
      %v1393 = vtanh.pop %v1347
      %v1394 = vtanh.pop %v1352
      %v1395 = vtanh.pop %v1355
      %v1396 = vtanh.pop %v1360
      %v1397 = vtanh.pop %v1363
      %s1398 = scalar_lea.vmem %s1, 128
      %v1399 = vld [vmem:[%s1398] sm:$0xf]
      %v1400 = vld [vmem:[%s1398 + $0x4] sm:$0xf]
      %v1401 = vld [vmem:[%s1398 + $0x8] sm:$0xf]
      %v1402 = vld [vmem:[%s1398 + $0xc] sm:$0xf]
      %v1403 = vld [vmem:[%s1398 + $0x10] sm:$0xf]
      %v1404 = vld [vmem:[%s1398 + $0x14] sm:$0xf]
      %v1405 = vld [vmem:[%s1398 + $0x18] sm:$0xf]
      %v1406 = vld [vmem:[%s1398 + $0x1c] sm:$0xf]
      %s1407 = scalar_lea.vmem %s2, 4
      %v1408 = vld [vmem:[%s1407] sm:$0x1]
      %v1409 = vpack.c.bf16 %v1367, %v1366
      %v1410 = vpack.c.bf16 %v1369, %v1368
      %v1411 = vpack.c.bf16 %v1371, %v1370
      %v1412 = vpack.c.bf16 %v1373, %v1372
      %v1413 = vpack.c.bf16 %v1375, %v1374
      %v1414 = vpack.c.bf16 %v1377, %v1376
      %v1415 = vpack.c.bf16 %v1379, %v1378
      %v1416 = vpack.c.bf16 %v1381, %v1380
      %v1417 = vpack.c.bf16 %v1383, %v1382
      %v1418 = vpack.c.bf16 %v1385, %v1384
      %v1419 = vpack.c.bf16 %v1387, %v1386
      %v1420 = vpack.c.bf16 %v1389, %v1388
      %v1421 = vpack.c.bf16 %v1391, %v1390
      %v1422 = vpack.c.bf16 %v1393, %v1392
      %v1423 = vpack.c.bf16 %v1395, %v1394
      %v1424 = vpack.c.bf16 %v1397, %v1396
      %v1426 = vlaneseq
      %v1427 = vshrl.u32 %v1426, 7
      %v1428 = vsub.s32 0, %v1427
      %v1429 = vrot.slane %v1408, %v1428
      %v1439 = vunpack.c.l.b16 %v1399
      %v1440 = vunpack.c.l.b16 %v1400
      %v1441 = vunpack.c.l.b16 %v1401
      %v1442 = vunpack.c.l.b16 %v1402
      %v1443 = vunpack.c.l.b16 %v1403
      %v1444 = vunpack.c.l.b16 %v1404
      %v1445 = vunpack.c.l.b16 %v1405
      %v1446 = vunpack.c.l.b16 %v1406
      %v1447 = vpack.c.b16 %v1440, %v1439
      %v1448 = vpack.c.b16 %v1442, %v1441
      %v1449 = vpack.c.b16 %v1444, %v1443
      %v1450 = vpack.c.b16 %v1446, %v1445
      %v1456 = vsel %vm262, %v1409, 0
      %v1459 = vsel %vm262, %v1410, 0
      %v1462 = vsel %vm262, %v1411, 0
      %v1465 = vsel %vm262, %v1412, 0
      %v1468 = vsel %vm262, %v1413, 0
      %v1471 = vsel %vm262, %v1414, 0
      %v1474 = vsel %vm262, %v1415, 0
      %v1477 = vsel %vm262, %v1416, 0
      %v1480 = vsel %vm262, %v1417, 0
      %v1483 = vsel %vm262, %v1418, 0
      %v1486 = vsel %vm262, %v1419, 0
      %v1489 = vsel %vm262, %v1420, 0
      %v1492 = vsel %vm262, %v1421, 0
      %v1495 = vsel %vm262, %v1422, 0
      %v1498 = vsel %vm262, %v1423, 0
      %v1501 = vsel %vm262, %v1424, 0
      %1503 = vmatprep.subr.bf16.mxu0 0
      %1504 = vmatpush1.bf16.msra.mxu0 %v1447
      %1505 = vmatprep.subr.bf16.mxu0 0
      %1506 = vmatpush1.bf16.msra.mxu0 %v1448
      %1507 = vmatprep.subr.bf16.mxu0 0
      %1508 = vmatpush1.bf16.msra.mxu0 %v1449
      %1509 = vmatprep.subr.bf16.mxu0 0
      %1510 = vmatpush1.bf16.msra.mxu0 %v1450
      %1511 = vmatprep.subr.bf16.mxu0 0
      %1512 = vmatpush1.bf16.msra.mxu0 0
      %1513 = vmatprep.subr.bf16.mxu0 0
      %1514 = vmatpush1.bf16.msra.mxu0 0
      %1515 = vmatprep.subr.bf16.mxu0 0
      %1516 = vmatpush1.bf16.msra.mxu0 0
      %1517 = vmatprep.subr.bf16.mxu0 0
      %1518 = vmatpush1.bf16.msra.mxu0 0
      %1519 = vmatprep.subr.bf16.mxu0 0
      %1520 = vmatpush1.bf16.msra.mxu0 0
      %1521 = vmatprep.subr.bf16.mxu0 0
      %1522 = vmatpush1.bf16.msra.mxu0 0
      %1523 = vmatprep.subr.bf16.mxu0 0
      %1524 = vmatpush1.bf16.msra.mxu0 0
      %1525 = vmatprep.subr.bf16.mxu0 0
      %1526 = vmatpush1.bf16.msra.mxu0 0
      %1527 = vmatprep.subr.bf16.mxu0 0
      %1528 = vmatpush1.bf16.msra.mxu0 0
      %1529 = vmatprep.subr.bf16.mxu0 0
      %1530 = vmatpush1.bf16.msra.mxu0 0
      %1531 = vmatprep.subr.bf16.mxu0 0
      %1532 = vmatpush1.bf16.msra.mxu0 0
      %1533 = vmatprep.subr.bf16.mxu0 0
      %1534 = vmatpush1.bf16.msra.mxu0 0
      %1535 = vmatprep.mubr.bf16.mxu0 0
      %1536 = vmatmul.mubr.bf16.gmra.mrb[0].mxu0 %v1456
      %v1537 = vpop.f32.mrb[0].mxu0
      %v1538 = vadd.f32 %v1429, %v1537
      %v1539 = vpop.f32.mrb[0].mxu0
      %v1540 = vpop.f32.mrb[0].mxu0
      %v1541 = vadd.f32 %v1429, %v1540
      %v1542 = vpop.f32.mrb[0].mxu0
      %1543 = vmatprep.mubr.bf16.mxu0 0
      %1544 = vmatmul.mubr.bf16.gmra.mrb[0].mxu0 %v1459
      %v1545 = vpop.f32.mrb[0].mxu0
      %v1546 = vadd.f32 %v1429, %v1545
      %v1547 = vpop.f32.mrb[0].mxu0
      %v1548 = vpop.f32.mrb[0].mxu0
      %v1549 = vadd.f32 %v1429, %v1548
      %v1550 = vpop.f32.mrb[0].mxu0
      %1551 = vmatprep.mubr.bf16.mxu0 0
      %1552 = vmatmul.mubr.bf16.gmra.mrb[0].mxu0 %v1462
      %v1553 = vpop.f32.mrb[0].mxu0
      %v1554 = vadd.f32 %v1429, %v1553
      %v1555 = vpop.f32.mrb[0].mxu0
      %v1556 = vpop.f32.mrb[0].mxu0
      %v1557 = vadd.f32 %v1429, %v1556
      %v1558 = vpop.f32.mrb[0].mxu0
      %1559 = vmatprep.mubr.bf16.mxu0 0
      %1560 = vmatmul.mubr.bf16.gmra.mrb[0].mxu0 %v1465
      %v1561 = vpop.f32.mrb[0].mxu0
      %v1562 = vadd.f32 %v1429, %v1561
      %v1563 = vpop.f32.mrb[0].mxu0
      %v1564 = vpop.f32.mrb[0].mxu0
      %v1565 = vadd.f32 %v1429, %v1564
      %v1566 = vpop.f32.mrb[0].mxu0
      %1567 = vmatprep.mubr.bf16.mxu0 0
      %1568 = vmatmul.mubr.bf16.gmra.mrb[0].mxu0 %v1468
      %v1569 = vpop.f32.mrb[0].mxu0
      %v1570 = vadd.f32 %v1429, %v1569
      %v1571 = vpop.f32.mrb[0].mxu0
      %v1572 = vpop.f32.mrb[0].mxu0
      %v1573 = vadd.f32 %v1429, %v1572
      %v1574 = vpop.f32.mrb[0].mxu0
      %1575 = vmatprep.mubr.bf16.mxu0 0
      %1576 = vmatmul.mubr.bf16.gmra.mrb[0].mxu0 %v1471
      %v1577 = vpop.f32.mrb[0].mxu0
      %v1578 = vadd.f32 %v1429, %v1577
      %v1579 = vpop.f32.mrb[0].mxu0
      %v1580 = vpop.f32.mrb[0].mxu0
      %v1581 = vadd.f32 %v1429, %v1580
      %v1582 = vpop.f32.mrb[0].mxu0
      %1583 = vmatprep.mubr.bf16.mxu0 0
      %1584 = vmatmul.mubr.bf16.gmra.mrb[0].mxu0 %v1474
      %v1585 = vpop.f32.mrb[0].mxu0
      %v1586 = vadd.f32 %v1429, %v1585
      %v1587 = vpop.f32.mrb[0].mxu0
      %v1588 = vpop.f32.mrb[0].mxu0
      %v1589 = vadd.f32 %v1429, %v1588
      %v1590 = vpop.f32.mrb[0].mxu0
      %1591 = vmatprep.mubr.bf16.mxu0 0
      %1592 = vmatmul.mubr.bf16.gmra.mrb[0].mxu0 %v1477
      %v1593 = vpop.f32.mrb[0].mxu0
      %v1594 = vadd.f32 %v1429, %v1593
      %v1595 = vpop.f32.mrb[0].mxu0
      %v1596 = vpop.f32.mrb[0].mxu0
      %v1597 = vadd.f32 %v1429, %v1596
      %v1598 = vpop.f32.mrb[0].mxu0
      %1599 = vmatprep.mubr.bf16.mxu0 0
      %1600 = vmatmul.mubr.bf16.gmra.mrb[0].mxu0 %v1480
      %v1601 = vpop.f32.mrb[0].mxu0
      %v1602 = vadd.f32 %v1429, %v1601
      %v1603 = vpop.f32.mrb[0].mxu0
      %v1604 = vpop.f32.mrb[0].mxu0
      %v1605 = vadd.f32 %v1429, %v1604
      %v1606 = vpop.f32.mrb[0].mxu0
      %1607 = vmatprep.mubr.bf16.mxu0 0
      %1608 = vmatmul.mubr.bf16.gmra.mrb[0].mxu0 %v1483
      %v1609 = vpop.f32.mrb[0].mxu0
      %v1610 = vadd.f32 %v1429, %v1609
      %v1611 = vpop.f32.mrb[0].mxu0
      %v1612 = vpop.f32.mrb[0].mxu0
      %v1613 = vadd.f32 %v1429, %v1612
      %v1614 = vpop.f32.mrb[0].mxu0
      %1615 = vmatprep.mubr.bf16.mxu0 0
      %1616 = vmatmul.mubr.bf16.gmra.mrb[0].mxu0 %v1486
      %v1617 = vpop.f32.mrb[0].mxu0
      %v1618 = vadd.f32 %v1429, %v1617
      %v1619 = vpop.f32.mrb[0].mxu0
      %v1620 = vpop.f32.mrb[0].mxu0
      %v1621 = vadd.f32 %v1429, %v1620
      %v1622 = vpop.f32.mrb[0].mxu0
      %1623 = vmatprep.mubr.bf16.mxu0 0
      %1624 = vmatmul.mubr.bf16.gmra.mrb[0].mxu0 %v1489
      %v1625 = vpop.f32.mrb[0].mxu0
      %v1626 = vadd.f32 %v1429, %v1625
      %v1627 = vpop.f32.mrb[0].mxu0
      %v1628 = vpop.f32.mrb[0].mxu0
      %v1629 = vadd.f32 %v1429, %v1628
      %v1630 = vpop.f32.mrb[0].mxu0
      %1631 = vmatprep.mubr.bf16.mxu0 0
      %1632 = vmatmul.mubr.bf16.gmra.mrb[0].mxu0 %v1492
      %v1633 = vpop.f32.mrb[0].mxu0
      %v1634 = vadd.f32 %v1429, %v1633
      %v1635 = vpop.f32.mrb[0].mxu0
      %v1636 = vpop.f32.mrb[0].mxu0
      %v1637 = vadd.f32 %v1429, %v1636
      %v1638 = vpop.f32.mrb[0].mxu0
      %1639 = vmatprep.mubr.bf16.mxu0 0
      %1640 = vmatmul.mubr.bf16.gmra.mrb[0].mxu0 %v1495
      %v1641 = vpop.f32.mrb[0].mxu0
      %v1642 = vadd.f32 %v1429, %v1641
      %v1643 = vpop.f32.mrb[0].mxu0
      %v1644 = vpop.f32.mrb[0].mxu0
      %v1645 = vadd.f32 %v1429, %v1644
      %v1646 = vpop.f32.mrb[0].mxu0
      %1647 = vmatprep.mubr.bf16.mxu0 0
      %1648 = vmatmul.mubr.bf16.gmra.mrb[0].mxu0 %v1498
      %v1649 = vpop.f32.mrb[0].mxu0
      %v1650 = vadd.f32 %v1429, %v1649
      %v1651 = vpop.f32.mrb[0].mxu0
      %v1652 = vpop.f32.mrb[0].mxu0
      %v1653 = vadd.f32 %v1429, %v1652
      %v1654 = vpop.f32.mrb[0].mxu0
      %1655 = vmatprep.mubr.bf16.mxu0 0
      %1656 = vmatmul.mubr.bf16.gmra.mrb[0].mxu0 %v1501
      %v1657 = vpop.f32.mrb[0].mxu0
      %v1658 = vadd.f32 %v1429, %v1657
      %v1659 = vpop.f32.mrb[0].mxu0
      %v1660 = vpop.f32.mrb[0].mxu0
      %v1661 = vadd.f32 %v1429, %v1660
      %v1662 = vpop.f32.mrb[0].mxu0
      %1663 = vdwg.mxu0
      %v1664 = vtanh.pop %v1538
      %v1665 = vtanh.pop %v1541
      %v1666 = vtanh.pop %v1546
      %v1667 = vtanh.pop %v1549
      %v1668 = vtanh.pop %v1554
      %v1669 = vtanh.pop %v1557
      %v1670 = vtanh.pop %v1562
      %v1671 = vtanh.pop %v1565
      %v1672 = vtanh.pop %v1570
      %v1673 = vtanh.pop %v1573
      %v1674 = vtanh.pop %v1578
      %v1675 = vtanh.pop %v1581
      %v1676 = vtanh.pop %v1586
      %v1677 = vtanh.pop %v1589
      %v1678 = vtanh.pop %v1594
      %v1679 = vtanh.pop %v1597
      %v1680 = vtanh.pop %v1602
      %v1681 = vtanh.pop %v1605
      %v1682 = vtanh.pop %v1610
      %v1683 = vtanh.pop %v1613
      %v1684 = vtanh.pop %v1618
      %v1685 = vtanh.pop %v1621
      %v1686 = vtanh.pop %v1626
      %v1687 = vtanh.pop %v1629
      %v1688 = vtanh.pop %v1634
      %v1689 = vtanh.pop %v1637
      %v1690 = vtanh.pop %v1642
      %v1691 = vtanh.pop %v1645
      %v1692 = vtanh.pop %v1650
      %v1693 = vtanh.pop %v1653
      %v1694 = vtanh.pop %v1658
      %v1695 = vtanh.pop %v1661
      %s1696 = scalar_lea.vmem %s1, 160
      %v1697 = vld [vmem:[%s1696] sm:$0xf]
      %v1698 = vld [vmem:[%s1696 + $0x4] sm:$0xf]
      %v1699 = vld [vmem:[%s1696 + $0x8] sm:$0xf]
      %v1700 = vld [vmem:[%s1696 + $0xc] sm:$0xf]
      %v1701 = vld [vmem:[%s1696 + $0x10] sm:$0xf]
      %v1702 = vld [vmem:[%s1696 + $0x14] sm:$0xf]
      %v1703 = vld [vmem:[%s1696 + $0x18] sm:$0xf]
      %v1704 = vld [vmem:[%s1696 + $0x1c] sm:$0xf]
      %s1705 = scalar_lea.vmem %s2, 5
      %v1706 = vld [vmem:[%s1705] sm:$0x1]
      %v1707 = vpack.c.bf16 %v1665, %v1664
      %v1708 = vpack.c.bf16 %v1667, %v1666
      %v1709 = vpack.c.bf16 %v1669, %v1668
      %v1710 = vpack.c.bf16 %v1671, %v1670
      %v1711 = vpack.c.bf16 %v1673, %v1672
      %v1712 = vpack.c.bf16 %v1675, %v1674
      %v1713 = vpack.c.bf16 %v1677, %v1676
      %v1714 = vpack.c.bf16 %v1679, %v1678
      %v1715 = vpack.c.bf16 %v1681, %v1680
      %v1716 = vpack.c.bf16 %v1683, %v1682
      %v1717 = vpack.c.bf16 %v1685, %v1684
      %v1718 = vpack.c.bf16 %v1687, %v1686
      %v1719 = vpack.c.bf16 %v1689, %v1688
      %v1720 = vpack.c.bf16 %v1691, %v1690
      %v1721 = vpack.c.bf16 %v1693, %v1692
      %v1722 = vpack.c.bf16 %v1695, %v1694
      %v1724 = vlaneseq
      %v1725 = vshrl.u32 %v1724, 7
      %v1726 = vsub.s32 0, %v1725
      %v1727 = vrot.slane %v1706, %v1726
      %v1737 = vunpack.c.l.b16 %v1697
      %v1738 = vunpack.c.l.b16 %v1698
      %v1739 = vunpack.c.l.b16 %v1699
      %v1740 = vunpack.c.l.b16 %v1700
      %v1741 = vunpack.c.l.b16 %v1701
      %v1742 = vunpack.c.l.b16 %v1702
      %v1743 = vunpack.c.l.b16 %v1703
      %v1744 = vunpack.c.l.b16 %v1704
      %v1745 = vpack.c.b16 %v1738, %v1737
      %v1746 = vpack.c.b16 %v1740, %v1739
      %v1747 = vpack.c.b16 %v1742, %v1741
      %v1748 = vpack.c.b16 %v1744, %v1743
      %v1754 = vsel %vm262, %v1707, 0
      %v1757 = vsel %vm262, %v1708, 0
      %v1760 = vsel %vm262, %v1709, 0
      %v1763 = vsel %vm262, %v1710, 0
      %v1766 = vsel %vm262, %v1711, 0
      %v1769 = vsel %vm262, %v1712, 0
      %v1772 = vsel %vm262, %v1713, 0
      %v1775 = vsel %vm262, %v1714, 0
      %v1778 = vsel %vm262, %v1715, 0
      %v1781 = vsel %vm262, %v1716, 0
      %v1784 = vsel %vm262, %v1717, 0
      %v1787 = vsel %vm262, %v1718, 0
      %v1790 = vsel %vm262, %v1719, 0
      %v1793 = vsel %vm262, %v1720, 0
      %v1796 = vsel %vm262, %v1721, 0
      %v1799 = vsel %vm262, %v1722, 0
      %1801 = vmatprep.subr.bf16.mxu0 0
      %1802 = vmatpush1.bf16.msra.mxu0 %v1745
      %1803 = vmatprep.subr.bf16.mxu0 0
      %1804 = vmatpush1.bf16.msra.mxu0 %v1746
      %1805 = vmatprep.subr.bf16.mxu0 0
      %1806 = vmatpush1.bf16.msra.mxu0 %v1747
      %1807 = vmatprep.subr.bf16.mxu0 0
      %1808 = vmatpush1.bf16.msra.mxu0 %v1748
      %1809 = vmatprep.subr.bf16.mxu0 0
      %1810 = vmatpush1.bf16.msra.mxu0 0
      %1811 = vmatprep.subr.bf16.mxu0 0
      %1812 = vmatpush1.bf16.msra.mxu0 0
      %1813 = vmatprep.subr.bf16.mxu0 0
      %1814 = vmatpush1.bf16.msra.mxu0 0
      %1815 = vmatprep.subr.bf16.mxu0 0
      %1816 = vmatpush1.bf16.msra.mxu0 0
      %1817 = vmatprep.subr.bf16.mxu0 0
      %1818 = vmatpush1.bf16.msra.mxu0 0
      %1819 = vmatprep.subr.bf16.mxu0 0
      %1820 = vmatpush1.bf16.msra.mxu0 0
      %1821 = vmatprep.subr.bf16.mxu0 0
      %1822 = vmatpush1.bf16.msra.mxu0 0
      %1823 = vmatprep.subr.bf16.mxu0 0
      %1824 = vmatpush1.bf16.msra.mxu0 0
      %1825 = vmatprep.subr.bf16.mxu0 0
      %1826 = vmatpush1.bf16.msra.mxu0 0
      %1827 = vmatprep.subr.bf16.mxu0 0
      %1828 = vmatpush1.bf16.msra.mxu0 0
      %1829 = vmatprep.subr.bf16.mxu0 0
      %1830 = vmatpush1.bf16.msra.mxu0 0
      %1831 = vmatprep.subr.bf16.mxu0 0
      %1832 = vmatpush1.bf16.msra.mxu0 0
      %1833 = vmatprep.mubr.bf16.mxu0 0
      %1834 = vmatmul.mubr.bf16.gmra.mrb[0].mxu0 %v1754
      %v1835 = vpop.f32.mrb[0].mxu0
      %v1836 = vadd.f32 %v1727, %v1835
      %v1837 = vpop.f32.mrb[0].mxu0
      %v1838 = vpop.f32.mrb[0].mxu0
      %v1839 = vadd.f32 %v1727, %v1838
      %v1840 = vpop.f32.mrb[0].mxu0
      %1841 = vmatprep.mubr.bf16.mxu0 0
      %1842 = vmatmul.mubr.bf16.gmra.mrb[0].mxu0 %v1757
      %v1843 = vpop.f32.mrb[0].mxu0
      %v1844 = vadd.f32 %v1727, %v1843
      %v1845 = vpop.f32.mrb[0].mxu0
      %v1846 = vpop.f32.mrb[0].mxu0
      %v1847 = vadd.f32 %v1727, %v1846
      %v1848 = vpop.f32.mrb[0].mxu0
      %1849 = vmatprep.mubr.bf16.mxu0 0
      %1850 = vmatmul.mubr.bf16.gmra.mrb[0].mxu0 %v1760
      %v1851 = vpop.f32.mrb[0].mxu0
      %v1852 = vadd.f32 %v1727, %v1851
      %v1853 = vpop.f32.mrb[0].mxu0
      %v1854 = vpop.f32.mrb[0].mxu0
      %v1855 = vadd.f32 %v1727, %v1854
      %v1856 = vpop.f32.mrb[0].mxu0
      %1857 = vmatprep.mubr.bf16.mxu0 0
      %1858 = vmatmul.mubr.bf16.gmra.mrb[0].mxu0 %v1763
      %v1859 = vpop.f32.mrb[0].mxu0
      %v1860 = vadd.f32 %v1727, %v1859
      %v1861 = vpop.f32.mrb[0].mxu0
      %v1862 = vpop.f32.mrb[0].mxu0
      %v1863 = vadd.f32 %v1727, %v1862
      %v1864 = vpop.f32.mrb[0].mxu0
      %1865 = vmatprep.mubr.bf16.mxu0 0
      %1866 = vmatmul.mubr.bf16.gmra.mrb[0].mxu0 %v1766
      %v1867 = vpop.f32.mrb[0].mxu0
      %v1868 = vadd.f32 %v1727, %v1867
      %v1869 = vpop.f32.mrb[0].mxu0
      %v1870 = vpop.f32.mrb[0].mxu0
      %v1871 = vadd.f32 %v1727, %v1870
      %v1872 = vpop.f32.mrb[0].mxu0
      %1873 = vmatprep.mubr.bf16.mxu0 0
      %1874 = vmatmul.mubr.bf16.gmra.mrb[0].mxu0 %v1769
      %v1875 = vpop.f32.mrb[0].mxu0
      %v1876 = vadd.f32 %v1727, %v1875
      %v1877 = vpop.f32.mrb[0].mxu0
      %v1878 = vpop.f32.mrb[0].mxu0
      %v1879 = vadd.f32 %v1727, %v1878
      %v1880 = vpop.f32.mrb[0].mxu0
      %1881 = vmatprep.mubr.bf16.mxu0 0
      %1882 = vmatmul.mubr.bf16.gmra.mrb[0].mxu0 %v1772
      %v1883 = vpop.f32.mrb[0].mxu0
      %v1884 = vadd.f32 %v1727, %v1883
      %v1885 = vpop.f32.mrb[0].mxu0
      %v1886 = vpop.f32.mrb[0].mxu0
      %v1887 = vadd.f32 %v1727, %v1886
      %v1888 = vpop.f32.mrb[0].mxu0
      %1889 = vmatprep.mubr.bf16.mxu0 0
      %1890 = vmatmul.mubr.bf16.gmra.mrb[0].mxu0 %v1775
      %v1891 = vpop.f32.mrb[0].mxu0
      %v1892 = vadd.f32 %v1727, %v1891
      %v1893 = vpop.f32.mrb[0].mxu0
      %v1894 = vpop.f32.mrb[0].mxu0
      %v1895 = vadd.f32 %v1727, %v1894
      %v1896 = vpop.f32.mrb[0].mxu0
      %1897 = vmatprep.mubr.bf16.mxu0 0
      %1898 = vmatmul.mubr.bf16.gmra.mrb[0].mxu0 %v1778
      %v1899 = vpop.f32.mrb[0].mxu0
      %v1900 = vadd.f32 %v1727, %v1899
      %v1901 = vpop.f32.mrb[0].mxu0
      %v1902 = vpop.f32.mrb[0].mxu0
      %v1903 = vadd.f32 %v1727, %v1902
      %v1904 = vpop.f32.mrb[0].mxu0
      %1905 = vmatprep.mubr.bf16.mxu0 0
      %1906 = vmatmul.mubr.bf16.gmra.mrb[0].mxu0 %v1781
      %v1907 = vpop.f32.mrb[0].mxu0
      %v1908 = vadd.f32 %v1727, %v1907
      %v1909 = vpop.f32.mrb[0].mxu0
      %v1910 = vpop.f32.mrb[0].mxu0
      %v1911 = vadd.f32 %v1727, %v1910
      %v1912 = vpop.f32.mrb[0].mxu0
      %1913 = vmatprep.mubr.bf16.mxu0 0
      %1914 = vmatmul.mubr.bf16.gmra.mrb[0].mxu0 %v1784
      %v1915 = vpop.f32.mrb[0].mxu0
      %v1916 = vadd.f32 %v1727, %v1915
      %v1917 = vpop.f32.mrb[0].mxu0
      %v1918 = vpop.f32.mrb[0].mxu0
      %v1919 = vadd.f32 %v1727, %v1918
      %v1920 = vpop.f32.mrb[0].mxu0
      %1921 = vmatprep.mubr.bf16.mxu0 0
      %1922 = vmatmul.mubr.bf16.gmra.mrb[0].mxu0 %v1787
      %v1923 = vpop.f32.mrb[0].mxu0
      %v1924 = vadd.f32 %v1727, %v1923
      %v1925 = vpop.f32.mrb[0].mxu0
      %v1926 = vpop.f32.mrb[0].mxu0
      %v1927 = vadd.f32 %v1727, %v1926
      %v1928 = vpop.f32.mrb[0].mxu0
      %1929 = vmatprep.mubr.bf16.mxu0 0
      %1930 = vmatmul.mubr.bf16.gmra.mrb[0].mxu0 %v1790
      %v1931 = vpop.f32.mrb[0].mxu0
      %v1932 = vadd.f32 %v1727, %v1931
      %v1933 = vpop.f32.mrb[0].mxu0
      %v1934 = vpop.f32.mrb[0].mxu0
      %v1935 = vadd.f32 %v1727, %v1934
      %v1936 = vpop.f32.mrb[0].mxu0
      %1937 = vmatprep.mubr.bf16.mxu0 0
      %1938 = vmatmul.mubr.bf16.gmra.mrb[0].mxu0 %v1793
      %v1939 = vpop.f32.mrb[0].mxu0
      %v1940 = vadd.f32 %v1727, %v1939
      %v1941 = vpop.f32.mrb[0].mxu0
      %v1942 = vpop.f32.mrb[0].mxu0
      %v1943 = vadd.f32 %v1727, %v1942
      %v1944 = vpop.f32.mrb[0].mxu0
      %1945 = vmatprep.mubr.bf16.mxu0 0
      %1946 = vmatmul.mubr.bf16.gmra.mrb[0].mxu0 %v1796
      %v1947 = vpop.f32.mrb[0].mxu0
      %v1948 = vadd.f32 %v1727, %v1947
      %v1949 = vpop.f32.mrb[0].mxu0
      %v1950 = vpop.f32.mrb[0].mxu0
      %v1951 = vadd.f32 %v1727, %v1950
      %v1952 = vpop.f32.mrb[0].mxu0
      %1953 = vmatprep.mubr.bf16.mxu0 0
      %1954 = vmatmul.mubr.bf16.gmra.mrb[0].mxu0 %v1799
      %v1955 = vpop.f32.mrb[0].mxu0
      %v1956 = vadd.f32 %v1727, %v1955
      %v1957 = vpop.f32.mrb[0].mxu0
      %v1958 = vpop.f32.mrb[0].mxu0
      %v1959 = vadd.f32 %v1727, %v1958
      %v1960 = vpop.f32.mrb[0].mxu0
      %1961 = vdwg.mxu0
      %v1962 = vtanh.pop %v1836
      %v1963 = vtanh.pop %v1839
      %v1964 = vtanh.pop %v1844
      %v1965 = vtanh.pop %v1847
      %v1966 = vtanh.pop %v1852
      %v1967 = vtanh.pop %v1855
      %v1968 = vtanh.pop %v1860
      %v1969 = vtanh.pop %v1863
      %v1970 = vtanh.pop %v1868
      %v1971 = vtanh.pop %v1871
      %v1972 = vtanh.pop %v1876
      %v1973 = vtanh.pop %v1879
      %v1974 = vtanh.pop %v1884
      %v1975 = vtanh.pop %v1887
      %v1976 = vtanh.pop %v1892
      %v1977 = vtanh.pop %v1895
      %v1978 = vtanh.pop %v1900
      %v1979 = vtanh.pop %v1903
      %v1980 = vtanh.pop %v1908
      %v1981 = vtanh.pop %v1911
      %v1982 = vtanh.pop %v1916
      %v1983 = vtanh.pop %v1919
      %v1984 = vtanh.pop %v1924
      %v1985 = vtanh.pop %v1927
      %v1986 = vtanh.pop %v1932
      %v1987 = vtanh.pop %v1935
      %v1988 = vtanh.pop %v1940
      %v1989 = vtanh.pop %v1943
      %v1990 = vtanh.pop %v1948
      %v1991 = vtanh.pop %v1951
      %v1992 = vtanh.pop %v1956
      %v1993 = vtanh.pop %v1959
      %s1994 = scalar_lea.vmem %s1, 192
      %v1995 = vld [vmem:[%s1994] sm:$0xf]
      %v1996 = vld [vmem:[%s1994 + $0x4] sm:$0xf]
      %v1997 = vld [vmem:[%s1994 + $0x8] sm:$0xf]
      %v1998 = vld [vmem:[%s1994 + $0xc] sm:$0xf]
      %v1999 = vld [vmem:[%s1994 + $0x10] sm:$0xf]
      %v2000 = vld [vmem:[%s1994 + $0x14] sm:$0xf]
      %v2001 = vld [vmem:[%s1994 + $0x18] sm:$0xf]
      %v2002 = vld [vmem:[%s1994 + $0x1c] sm:$0xf]
      %s2003 = scalar_lea.vmem %s2, 6
      %v2004 = vld [vmem:[%s2003] sm:$0x1]
      %v2005 = vpack.c.bf16 %v1963, %v1962
      %v2006 = vpack.c.bf16 %v1965, %v1964
      %v2007 = vpack.c.bf16 %v1967, %v1966
      %v2008 = vpack.c.bf16 %v1969, %v1968
      %v2009 = vpack.c.bf16 %v1971, %v1970
      %v2010 = vpack.c.bf16 %v1973, %v1972
      %v2011 = vpack.c.bf16 %v1975, %v1974
      %v2012 = vpack.c.bf16 %v1977, %v1976
      %v2013 = vpack.c.bf16 %v1979, %v1978
      %v2014 = vpack.c.bf16 %v1981, %v1980
      %v2015 = vpack.c.bf16 %v1983, %v1982
      %v2016 = vpack.c.bf16 %v1985, %v1984
      %v2017 = vpack.c.bf16 %v1987, %v1986
      %v2018 = vpack.c.bf16 %v1989, %v1988
      %v2019 = vpack.c.bf16 %v1991, %v1990
      %v2020 = vpack.c.bf16 %v1993, %v1992
      %v2022 = vlaneseq
      %v2023 = vshrl.u32 %v2022, 7
      %v2024 = vsub.s32 0, %v2023
      %v2025 = vrot.slane %v2004, %v2024
      %v2035 = vunpack.c.l.b16 %v1995
      %v2036 = vunpack.c.l.b16 %v1996
      %v2037 = vunpack.c.l.b16 %v1997
      %v2038 = vunpack.c.l.b16 %v1998
      %v2039 = vunpack.c.l.b16 %v1999
      %v2040 = vunpack.c.l.b16 %v2000
      %v2041 = vunpack.c.l.b16 %v2001
      %v2042 = vunpack.c.l.b16 %v2002
      %v2043 = vpack.c.b16 %v2036, %v2035
      %v2044 = vpack.c.b16 %v2038, %v2037
      %v2045 = vpack.c.b16 %v2040, %v2039
      %v2046 = vpack.c.b16 %v2042, %v2041
      %v2052 = vsel %vm262, %v2005, 0
      %v2055 = vsel %vm262, %v2006, 0
      %v2058 = vsel %vm262, %v2007, 0
      %v2061 = vsel %vm262, %v2008, 0
      %v2064 = vsel %vm262, %v2009, 0
      %v2067 = vsel %vm262, %v2010, 0
      %v2070 = vsel %vm262, %v2011, 0
      %v2073 = vsel %vm262, %v2012, 0
      %v2076 = vsel %vm262, %v2013, 0
      %v2079 = vsel %vm262, %v2014, 0
      %v2082 = vsel %vm262, %v2015, 0
      %v2085 = vsel %vm262, %v2016, 0
      %v2088 = vsel %vm262, %v2017, 0
      %v2091 = vsel %vm262, %v2018, 0
      %v2094 = vsel %vm262, %v2019, 0
      %v2097 = vsel %vm262, %v2020, 0
      %2099 = vmatprep.subr.bf16.mxu0 0
      %2100 = vmatpush1.bf16.msra.mxu0 %v2043
      %2101 = vmatprep.subr.bf16.mxu0 0
      %2102 = vmatpush1.bf16.msra.mxu0 %v2044
      %2103 = vmatprep.subr.bf16.mxu0 0
      %2104 = vmatpush1.bf16.msra.mxu0 %v2045
      %2105 = vmatprep.subr.bf16.mxu0 0
      %2106 = vmatpush1.bf16.msra.mxu0 %v2046
      %2107 = vmatprep.subr.bf16.mxu0 0
      %2108 = vmatpush1.bf16.msra.mxu0 0
      %2109 = vmatprep.subr.bf16.mxu0 0
      %2110 = vmatpush1.bf16.msra.mxu0 0
      %2111 = vmatprep.subr.bf16.mxu0 0
      %2112 = vmatpush1.bf16.msra.mxu0 0
      %2113 = vmatprep.subr.bf16.mxu0 0
      %2114 = vmatpush1.bf16.msra.mxu0 0
      %2115 = vmatprep.subr.bf16.mxu0 0
      %2116 = vmatpush1.bf16.msra.mxu0 0
      %2117 = vmatprep.subr.bf16.mxu0 0
      %2118 = vmatpush1.bf16.msra.mxu0 0
      %2119 = vmatprep.subr.bf16.mxu0 0
      %2120 = vmatpush1.bf16.msra.mxu0 0
      %2121 = vmatprep.subr.bf16.mxu0 0
      %2122 = vmatpush1.bf16.msra.mxu0 0
      %2123 = vmatprep.subr.bf16.mxu0 0
      %2124 = vmatpush1.bf16.msra.mxu0 0
      %2125 = vmatprep.subr.bf16.mxu0 0
      %2126 = vmatpush1.bf16.msra.mxu0 0
      %2127 = vmatprep.subr.bf16.mxu0 0
      %2128 = vmatpush1.bf16.msra.mxu0 0
      %2129 = vmatprep.subr.bf16.mxu0 0
      %2130 = vmatpush1.bf16.msra.mxu0 0
      %2131 = vmatprep.mubr.bf16.mxu0 0
      %2132 = vmatmul.mubr.bf16.gmra.mrb[0].mxu0 %v2052
      %v2133 = vpop.f32.mrb[0].mxu0
      %v2134 = vadd.f32 %v2025, %v2133
      %v2135 = vpop.f32.mrb[0].mxu0
      %v2136 = vpop.f32.mrb[0].mxu0
      %v2137 = vadd.f32 %v2025, %v2136
      %v2138 = vpop.f32.mrb[0].mxu0
      %2139 = vmatprep.mubr.bf16.mxu0 0
      %2140 = vmatmul.mubr.bf16.gmra.mrb[0].mxu0 %v2055
      %v2141 = vpop.f32.mrb[0].mxu0
      %v2142 = vadd.f32 %v2025, %v2141
      %v2143 = vpop.f32.mrb[0].mxu0
      %v2144 = vpop.f32.mrb[0].mxu0
      %v2145 = vadd.f32 %v2025, %v2144
      %v2146 = vpop.f32.mrb[0].mxu0
      %2147 = vmatprep.mubr.bf16.mxu0 0
      %2148 = vmatmul.mubr.bf16.gmra.mrb[0].mxu0 %v2058
      %v2149 = vpop.f32.mrb[0].mxu0
      %v2150 = vadd.f32 %v2025, %v2149
      %v2151 = vpop.f32.mrb[0].mxu0
      %v2152 = vpop.f32.mrb[0].mxu0
      %v2153 = vadd.f32 %v2025, %v2152
      %v2154 = vpop.f32.mrb[0].mxu0
      %2155 = vmatprep.mubr.bf16.mxu0 0
      %2156 = vmatmul.mubr.bf16.gmra.mrb[0].mxu0 %v2061
      %v2157 = vpop.f32.mrb[0].mxu0
      %v2158 = vadd.f32 %v2025, %v2157
      %v2159 = vpop.f32.mrb[0].mxu0
      %v2160 = vpop.f32.mrb[0].mxu0
      %v2161 = vadd.f32 %v2025, %v2160
      %v2162 = vpop.f32.mrb[0].mxu0
      %2163 = vmatprep.mubr.bf16.mxu0 0
      %2164 = vmatmul.mubr.bf16.gmra.mrb[0].mxu0 %v2064
      %v2165 = vpop.f32.mrb[0].mxu0
      %v2166 = vadd.f32 %v2025, %v2165
      %v2167 = vpop.f32.mrb[0].mxu0
      %v2168 = vpop.f32.mrb[0].mxu0
      %v2169 = vadd.f32 %v2025, %v2168
      %v2170 = vpop.f32.mrb[0].mxu0
      %2171 = vmatprep.mubr.bf16.mxu0 0
      %2172 = vmatmul.mubr.bf16.gmra.mrb[0].mxu0 %v2067
      %v2173 = vpop.f32.mrb[0].mxu0
      %v2174 = vadd.f32 %v2025, %v2173
      %v2175 = vpop.f32.mrb[0].mxu0
      %v2176 = vpop.f32.mrb[0].mxu0
      %v2177 = vadd.f32 %v2025, %v2176
      %v2178 = vpop.f32.mrb[0].mxu0
      %2179 = vmatprep.mubr.bf16.mxu0 0
      %2180 = vmatmul.mubr.bf16.gmra.mrb[0].mxu0 %v2070
      %v2181 = vpop.f32.mrb[0].mxu0
      %v2182 = vadd.f32 %v2025, %v2181
      %v2183 = vpop.f32.mrb[0].mxu0
      %v2184 = vpop.f32.mrb[0].mxu0
      %v2185 = vadd.f32 %v2025, %v2184
      %v2186 = vpop.f32.mrb[0].mxu0
      %2187 = vmatprep.mubr.bf16.mxu0 0
      %2188 = vmatmul.mubr.bf16.gmra.mrb[0].mxu0 %v2073
      %v2189 = vpop.f32.mrb[0].mxu0
      %v2190 = vadd.f32 %v2025, %v2189
      %v2191 = vpop.f32.mrb[0].mxu0
      %v2192 = vpop.f32.mrb[0].mxu0
      %v2193 = vadd.f32 %v2025, %v2192
      %v2194 = vpop.f32.mrb[0].mxu0
      %2195 = vmatprep.mubr.bf16.mxu0 0
      %2196 = vmatmul.mubr.bf16.gmra.mrb[0].mxu0 %v2076
      %v2197 = vpop.f32.mrb[0].mxu0
      %v2198 = vadd.f32 %v2025, %v2197
      %v2199 = vpop.f32.mrb[0].mxu0
      %v2200 = vpop.f32.mrb[0].mxu0
      %v2201 = vadd.f32 %v2025, %v2200
      %v2202 = vpop.f32.mrb[0].mxu0
      %2203 = vmatprep.mubr.bf16.mxu0 0
      %2204 = vmatmul.mubr.bf16.gmra.mrb[0].mxu0 %v2079
      %v2205 = vpop.f32.mrb[0].mxu0
      %v2206 = vadd.f32 %v2025, %v2205
      %v2207 = vpop.f32.mrb[0].mxu0
      %v2208 = vpop.f32.mrb[0].mxu0
      %v2209 = vadd.f32 %v2025, %v2208
      %v2210 = vpop.f32.mrb[0].mxu0
      %2211 = vmatprep.mubr.bf16.mxu0 0
      %2212 = vmatmul.mubr.bf16.gmra.mrb[0].mxu0 %v2082
      %v2213 = vpop.f32.mrb[0].mxu0
      %v2214 = vadd.f32 %v2025, %v2213
      %v2215 = vpop.f32.mrb[0].mxu0
      %v2216 = vpop.f32.mrb[0].mxu0
      %v2217 = vadd.f32 %v2025, %v2216
      %v2218 = vpop.f32.mrb[0].mxu0
      %2219 = vmatprep.mubr.bf16.mxu0 0
      %2220 = vmatmul.mubr.bf16.gmra.mrb[0].mxu0 %v2085
      %v2221 = vpop.f32.mrb[0].mxu0
      %v2222 = vadd.f32 %v2025, %v2221
      %v2223 = vpop.f32.mrb[0].mxu0
      %v2224 = vpop.f32.mrb[0].mxu0
      %v2225 = vadd.f32 %v2025, %v2224
      %v2226 = vpop.f32.mrb[0].mxu0
      %2227 = vmatprep.mubr.bf16.mxu0 0
      %2228 = vmatmul.mubr.bf16.gmra.mrb[0].mxu0 %v2088
      %v2229 = vpop.f32.mrb[0].mxu0
      %v2230 = vadd.f32 %v2025, %v2229
      %v2231 = vpop.f32.mrb[0].mxu0
      %v2232 = vpop.f32.mrb[0].mxu0
      %v2233 = vadd.f32 %v2025, %v2232
      %v2234 = vpop.f32.mrb[0].mxu0
      %2235 = vmatprep.mubr.bf16.mxu0 0
      %2236 = vmatmul.mubr.bf16.gmra.mrb[0].mxu0 %v2091
      %v2237 = vpop.f32.mrb[0].mxu0
      %v2238 = vadd.f32 %v2025, %v2237
      %v2239 = vpop.f32.mrb[0].mxu0
      %v2240 = vpop.f32.mrb[0].mxu0
      %v2241 = vadd.f32 %v2025, %v2240
      %v2242 = vpop.f32.mrb[0].mxu0
      %2243 = vmatprep.mubr.bf16.mxu0 0
      %2244 = vmatmul.mubr.bf16.gmra.mrb[0].mxu0 %v2094
      %v2245 = vpop.f32.mrb[0].mxu0
      %v2246 = vadd.f32 %v2025, %v2245
      %v2247 = vpop.f32.mrb[0].mxu0
      %v2248 = vpop.f32.mrb[0].mxu0
      %v2249 = vadd.f32 %v2025, %v2248
      %v2250 = vpop.f32.mrb[0].mxu0
      %2251 = vmatprep.mubr.bf16.mxu0 0
      %2252 = vmatmul.mubr.bf16.gmra.mrb[0].mxu0 %v2097
      %v2253 = vpop.f32.mrb[0].mxu0
      %v2254 = vadd.f32 %v2025, %v2253
      %v2255 = vpop.f32.mrb[0].mxu0
      %v2256 = vpop.f32.mrb[0].mxu0
      %v2257 = vadd.f32 %v2025, %v2256
      %v2258 = vpop.f32.mrb[0].mxu0
      %2259 = vdwg.mxu0
      %v2260 = vtanh.pop %v2134
      %v2261 = vtanh.pop %v2137
      %v2262 = vtanh.pop %v2142
      %v2263 = vtanh.pop %v2145
      %v2264 = vtanh.pop %v2150
      %v2265 = vtanh.pop %v2153
      %v2266 = vtanh.pop %v2158
      %v2267 = vtanh.pop %v2161
      %v2268 = vtanh.pop %v2166
      %v2269 = vtanh.pop %v2169
      %v2270 = vtanh.pop %v2174
      %v2271 = vtanh.pop %v2177
      %v2272 = vtanh.pop %v2182
      %v2273 = vtanh.pop %v2185
      %v2274 = vtanh.pop %v2190
      %v2275 = vtanh.pop %v2193
      %v2276 = vtanh.pop %v2198
      %v2277 = vtanh.pop %v2201
      %v2278 = vtanh.pop %v2206
      %v2279 = vtanh.pop %v2209
      %v2280 = vtanh.pop %v2214
      %v2281 = vtanh.pop %v2217
      %v2282 = vtanh.pop %v2222
      %v2283 = vtanh.pop %v2225
      %v2284 = vtanh.pop %v2230
      %v2285 = vtanh.pop %v2233
      %v2286 = vtanh.pop %v2238
      %v2287 = vtanh.pop %v2241
      %v2288 = vtanh.pop %v2246
      %v2289 = vtanh.pop %v2249
      %v2290 = vtanh.pop %v2254
      %v2291 = vtanh.pop %v2257
      %s2292 = scalar_lea.vmem %s1, 224
      %v2293 = vld [vmem:[%s2292] sm:$0xf]
      %v2294 = vld [vmem:[%s2292 + $0x4] sm:$0xf]
      %v2295 = vld [vmem:[%s2292 + $0x8] sm:$0xf]
      %v2296 = vld [vmem:[%s2292 + $0xc] sm:$0xf]
      %v2297 = vld [vmem:[%s2292 + $0x10] sm:$0xf]
      %v2298 = vld [vmem:[%s2292 + $0x14] sm:$0xf]
      %v2299 = vld [vmem:[%s2292 + $0x18] sm:$0xf]
      %v2300 = vld [vmem:[%s2292 + $0x1c] sm:$0xf]
      %s2301 = scalar_lea.vmem %s2, 7
      %v2302 = vld [vmem:[%s2301] sm:$0x1]
      %v2303 = vpack.c.bf16 %v2261, %v2260
      %v2304 = vpack.c.bf16 %v2263, %v2262
      %v2305 = vpack.c.bf16 %v2265, %v2264
      %v2306 = vpack.c.bf16 %v2267, %v2266
      %v2307 = vpack.c.bf16 %v2269, %v2268
      %v2308 = vpack.c.bf16 %v2271, %v2270
      %v2309 = vpack.c.bf16 %v2273, %v2272
      %v2310 = vpack.c.bf16 %v2275, %v2274
      %v2311 = vpack.c.bf16 %v2277, %v2276
      %v2312 = vpack.c.bf16 %v2279, %v2278
      %v2313 = vpack.c.bf16 %v2281, %v2280
      %v2314 = vpack.c.bf16 %v2283, %v2282
      %v2315 = vpack.c.bf16 %v2285, %v2284
      %v2316 = vpack.c.bf16 %v2287, %v2286
      %v2317 = vpack.c.bf16 %v2289, %v2288
      %v2318 = vpack.c.bf16 %v2291, %v2290
      %v2320 = vlaneseq
      %v2321 = vshrl.u32 %v2320, 7
      %v2322 = vsub.s32 0, %v2321
      %v2323 = vrot.slane %v2302, %v2322
      %v2333 = vunpack.c.l.b16 %v2293
      %v2334 = vunpack.c.l.b16 %v2294
      %v2335 = vunpack.c.l.b16 %v2295
      %v2336 = vunpack.c.l.b16 %v2296
      %v2337 = vunpack.c.l.b16 %v2297
      %v2338 = vunpack.c.l.b16 %v2298
      %v2339 = vunpack.c.l.b16 %v2299
      %v2340 = vunpack.c.l.b16 %v2300
      %v2341 = vpack.c.b16 %v2334, %v2333
      %v2342 = vpack.c.b16 %v2336, %v2335
      %v2343 = vpack.c.b16 %v2338, %v2337
      %v2344 = vpack.c.b16 %v2340, %v2339
      %v2350 = vsel %vm262, %v2303, 0
      %v2353 = vsel %vm262, %v2304, 0
      %v2356 = vsel %vm262, %v2305, 0
      %v2359 = vsel %vm262, %v2306, 0
      %v2362 = vsel %vm262, %v2307, 0
      %v2365 = vsel %vm262, %v2308, 0
      %v2368 = vsel %vm262, %v2309, 0
      %v2371 = vsel %vm262, %v2310, 0
      %v2374 = vsel %vm262, %v2311, 0
      %v2377 = vsel %vm262, %v2312, 0
      %v2380 = vsel %vm262, %v2313, 0
      %v2383 = vsel %vm262, %v2314, 0
      %v2386 = vsel %vm262, %v2315, 0
      %v2389 = vsel %vm262, %v2316, 0
      %v2392 = vsel %vm262, %v2317, 0
      %v2395 = vsel %vm262, %v2318, 0
      %2397 = vmatprep.subr.bf16.mxu0 0
      %2398 = vmatpush1.bf16.msra.mxu0 %v2341
      %2399 = vmatprep.subr.bf16.mxu0 0
      %2400 = vmatpush1.bf16.msra.mxu0 %v2342
      %2401 = vmatprep.subr.bf16.mxu0 0
      %2402 = vmatpush1.bf16.msra.mxu0 %v2343
      %2403 = vmatprep.subr.bf16.mxu0 0
      %2404 = vmatpush1.bf16.msra.mxu0 %v2344
      %2405 = vmatprep.subr.bf16.mxu0 0
      %2406 = vmatpush1.bf16.msra.mxu0 0
      %2407 = vmatprep.subr.bf16.mxu0 0
      %2408 = vmatpush1.bf16.msra.mxu0 0
      %2409 = vmatprep.subr.bf16.mxu0 0
      %2410 = vmatpush1.bf16.msra.mxu0 0
      %2411 = vmatprep.subr.bf16.mxu0 0
      %2412 = vmatpush1.bf16.msra.mxu0 0
      %2413 = vmatprep.subr.bf16.mxu0 0
      %2414 = vmatpush1.bf16.msra.mxu0 0
      %2415 = vmatprep.subr.bf16.mxu0 0
      %2416 = vmatpush1.bf16.msra.mxu0 0
      %2417 = vmatprep.subr.bf16.mxu0 0
      %2418 = vmatpush1.bf16.msra.mxu0 0
      %2419 = vmatprep.subr.bf16.mxu0 0
      %2420 = vmatpush1.bf16.msra.mxu0 0
      %2421 = vmatprep.subr.bf16.mxu0 0
      %2422 = vmatpush1.bf16.msra.mxu0 0
      %2423 = vmatprep.subr.bf16.mxu0 0
      %2424 = vmatpush1.bf16.msra.mxu0 0
      %2425 = vmatprep.subr.bf16.mxu0 0
      %2426 = vmatpush1.bf16.msra.mxu0 0
      %2427 = vmatprep.subr.bf16.mxu0 0
      %2428 = vmatpush1.bf16.msra.mxu0 0
      %2429 = vmatprep.mubr.bf16.mxu0 0
      %2430 = vmatmul.mubr.bf16.gmra.mrb[0].mxu0 %v2350
      %v2431 = vpop.f32.mrb[0].mxu0
      %v2432 = vadd.f32 %v2323, %v2431
      %v2433 = vpop.f32.mrb[0].mxu0
      %v2434 = vpop.f32.mrb[0].mxu0
      %v2435 = vadd.f32 %v2323, %v2434
      %v2436 = vpop.f32.mrb[0].mxu0
      %2437 = vmatprep.mubr.bf16.mxu0 0
      %2438 = vmatmul.mubr.bf16.gmra.mrb[0].mxu0 %v2353
      %v2439 = vpop.f32.mrb[0].mxu0
      %v2440 = vadd.f32 %v2323, %v2439
      %v2441 = vpop.f32.mrb[0].mxu0
      %v2442 = vpop.f32.mrb[0].mxu0
      %v2443 = vadd.f32 %v2323, %v2442
      %v2444 = vpop.f32.mrb[0].mxu0
      %2445 = vmatprep.mubr.bf16.mxu0 0
      %2446 = vmatmul.mubr.bf16.gmra.mrb[0].mxu0 %v2356
      %v2447 = vpop.f32.mrb[0].mxu0
      %v2448 = vadd.f32 %v2323, %v2447
      %v2449 = vpop.f32.mrb[0].mxu0
      %v2450 = vpop.f32.mrb[0].mxu0
      %v2451 = vadd.f32 %v2323, %v2450
      %v2452 = vpop.f32.mrb[0].mxu0
      %2453 = vmatprep.mubr.bf16.mxu0 0
      %2454 = vmatmul.mubr.bf16.gmra.mrb[0].mxu0 %v2359
      %v2455 = vpop.f32.mrb[0].mxu0
      %v2456 = vadd.f32 %v2323, %v2455
      %v2457 = vpop.f32.mrb[0].mxu0
      %v2458 = vpop.f32.mrb[0].mxu0
      %v2459 = vadd.f32 %v2323, %v2458
      %v2460 = vpop.f32.mrb[0].mxu0
      %2461 = vmatprep.mubr.bf16.mxu0 0
      %2462 = vmatmul.mubr.bf16.gmra.mrb[0].mxu0 %v2362
      %v2463 = vpop.f32.mrb[0].mxu0
      %v2464 = vadd.f32 %v2323, %v2463
      %v2465 = vpop.f32.mrb[0].mxu0
      %v2466 = vpop.f32.mrb[0].mxu0
      %v2467 = vadd.f32 %v2323, %v2466
      %v2468 = vpop.f32.mrb[0].mxu0
      %2469 = vmatprep.mubr.bf16.mxu0 0
      %2470 = vmatmul.mubr.bf16.gmra.mrb[0].mxu0 %v2365
      %v2471 = vpop.f32.mrb[0].mxu0
      %v2472 = vadd.f32 %v2323, %v2471
      %v2473 = vpop.f32.mrb[0].mxu0
      %v2474 = vpop.f32.mrb[0].mxu0
      %v2475 = vadd.f32 %v2323, %v2474
      %v2476 = vpop.f32.mrb[0].mxu0
      %2477 = vmatprep.mubr.bf16.mxu0 0
      %2478 = vmatmul.mubr.bf16.gmra.mrb[0].mxu0 %v2368
      %v2479 = vpop.f32.mrb[0].mxu0
      %v2480 = vadd.f32 %v2323, %v2479
      %v2481 = vpop.f32.mrb[0].mxu0
      %v2482 = vpop.f32.mrb[0].mxu0
      %v2483 = vadd.f32 %v2323, %v2482
      %v2484 = vpop.f32.mrb[0].mxu0
      %2485 = vmatprep.mubr.bf16.mxu0 0
      %2486 = vmatmul.mubr.bf16.gmra.mrb[0].mxu0 %v2371
      %v2487 = vpop.f32.mrb[0].mxu0
      %v2488 = vadd.f32 %v2323, %v2487
      %v2489 = vpop.f32.mrb[0].mxu0
      %v2490 = vpop.f32.mrb[0].mxu0
      %v2491 = vadd.f32 %v2323, %v2490
      %v2492 = vpop.f32.mrb[0].mxu0
      %2493 = vmatprep.mubr.bf16.mxu0 0
      %2494 = vmatmul.mubr.bf16.gmra.mrb[0].mxu0 %v2374
      %v2495 = vpop.f32.mrb[0].mxu0
      %v2496 = vadd.f32 %v2323, %v2495
      %v2497 = vpop.f32.mrb[0].mxu0
      %v2498 = vpop.f32.mrb[0].mxu0
      %v2499 = vadd.f32 %v2323, %v2498
      %v2500 = vpop.f32.mrb[0].mxu0
      %2501 = vmatprep.mubr.bf16.mxu0 0
      %2502 = vmatmul.mubr.bf16.gmra.mrb[0].mxu0 %v2377
      %v2503 = vpop.f32.mrb[0].mxu0
      %v2504 = vadd.f32 %v2323, %v2503
      %v2505 = vpop.f32.mrb[0].mxu0
      %v2506 = vpop.f32.mrb[0].mxu0
      %v2507 = vadd.f32 %v2323, %v2506
      %v2508 = vpop.f32.mrb[0].mxu0
      %2509 = vmatprep.mubr.bf16.mxu0 0
      %2510 = vmatmul.mubr.bf16.gmra.mrb[0].mxu0 %v2380
      %v2511 = vpop.f32.mrb[0].mxu0
      %v2512 = vadd.f32 %v2323, %v2511
      %v2513 = vpop.f32.mrb[0].mxu0
      %v2514 = vpop.f32.mrb[0].mxu0
      %v2515 = vadd.f32 %v2323, %v2514
      %v2516 = vpop.f32.mrb[0].mxu0
      %2517 = vmatprep.mubr.bf16.mxu0 0
      %2518 = vmatmul.mubr.bf16.gmra.mrb[0].mxu0 %v2383
      %v2519 = vpop.f32.mrb[0].mxu0
      %v2520 = vadd.f32 %v2323, %v2519
      %v2521 = vpop.f32.mrb[0].mxu0
      %v2522 = vpop.f32.mrb[0].mxu0
      %v2523 = vadd.f32 %v2323, %v2522
      %v2524 = vpop.f32.mrb[0].mxu0
      %2525 = vmatprep.mubr.bf16.mxu0 0
      %2526 = vmatmul.mubr.bf16.gmra.mrb[0].mxu0 %v2386
      %v2527 = vpop.f32.mrb[0].mxu0
      %v2528 = vadd.f32 %v2323, %v2527
      %v2529 = vpop.f32.mrb[0].mxu0
      %v2530 = vpop.f32.mrb[0].mxu0
      %v2531 = vadd.f32 %v2323, %v2530
      %v2532 = vpop.f32.mrb[0].mxu0
      %2533 = vmatprep.mubr.bf16.mxu0 0
      %2534 = vmatmul.mubr.bf16.gmra.mrb[0].mxu0 %v2389
      %v2535 = vpop.f32.mrb[0].mxu0
      %v2536 = vadd.f32 %v2323, %v2535
      %v2537 = vpop.f32.mrb[0].mxu0
      %v2538 = vpop.f32.mrb[0].mxu0
      %v2539 = vadd.f32 %v2323, %v2538
      %v2540 = vpop.f32.mrb[0].mxu0
      %2541 = vmatprep.mubr.bf16.mxu0 0
      %2542 = vmatmul.mubr.bf16.gmra.mrb[0].mxu0 %v2392
      %v2543 = vpop.f32.mrb[0].mxu0
      %v2544 = vadd.f32 %v2323, %v2543
      %v2545 = vpop.f32.mrb[0].mxu0
      %v2546 = vpop.f32.mrb[0].mxu0
      %v2547 = vadd.f32 %v2323, %v2546
      %v2548 = vpop.f32.mrb[0].mxu0
      %2549 = vmatprep.mubr.bf16.mxu0 0
      %2550 = vmatmul.mubr.bf16.gmra.mrb[0].mxu0 %v2395
      %v2551 = vpop.f32.mrb[0].mxu0
      %v2552 = vadd.f32 %v2323, %v2551
      %v2553 = vpop.f32.mrb[0].mxu0
      %v2554 = vpop.f32.mrb[0].mxu0
      %v2555 = vadd.f32 %v2323, %v2554
      %v2556 = vpop.f32.mrb[0].mxu0
      %2557 = vdwg.mxu0
      %v2558 = vtanh.pop %v2432
      %v2559 = vtanh.pop %v2435
      %v2560 = vtanh.pop %v2440
      %v2561 = vtanh.pop %v2443
      %v2562 = vtanh.pop %v2448
      %v2563 = vtanh.pop %v2451
      %v2564 = vtanh.pop %v2456
      %v2565 = vtanh.pop %v2459
      %v2566 = vtanh.pop %v2464
      %v2567 = vtanh.pop %v2467
      %v2568 = vtanh.pop %v2472
      %v2569 = vtanh.pop %v2475
      %v2570 = vtanh.pop %v2480
      %v2571 = vtanh.pop %v2483
      %v2572 = vtanh.pop %v2488
      %v2573 = vtanh.pop %v2491
      %v2574 = vtanh.pop %v2496
      %v2575 = vtanh.pop %v2499
      %v2576 = vtanh.pop %v2504
      %v2577 = vtanh.pop %v2507
      %v2578 = vtanh.pop %v2512
      %v2579 = vtanh.pop %v2515
      %v2580 = vtanh.pop %v2520
      %v2581 = vtanh.pop %v2523
      %v2582 = vtanh.pop %v2528
      %v2583 = vtanh.pop %v2531
      %v2584 = vtanh.pop %v2536
      %v2585 = vtanh.pop %v2539
      %v2586 = vtanh.pop %v2544
      %v2587 = vtanh.pop %v2547
      %v2588 = vtanh.pop %v2552
      %v2589 = vtanh.pop %v2555
      %s2590 = scalar_lea.vmem %s1, 256
      %v2591 = vld [vmem:[%s2590] sm:$0xf]
      %v2592 = vld [vmem:[%s2590 + $0x4] sm:$0xf]
      %v2593 = vld [vmem:[%s2590 + $0x8] sm:$0xf]
      %v2594 = vld [vmem:[%s2590 + $0xc] sm:$0xf]
      %v2595 = vld [vmem:[%s2590 + $0x10] sm:$0xf]
      %v2596 = vld [vmem:[%s2590 + $0x14] sm:$0xf]
      %v2597 = vld [vmem:[%s2590 + $0x18] sm:$0xf]
      %v2598 = vld [vmem:[%s2590 + $0x1c] sm:$0xf]
      %s2599 = scalar_lea.vmem %s2, 8
      %v2600 = vld [vmem:[%s2599] sm:$0x1]
      %v2601 = vpack.c.bf16 %v2559, %v2558
      %v2602 = vpack.c.bf16 %v2561, %v2560
      %v2603 = vpack.c.bf16 %v2563, %v2562
      %v2604 = vpack.c.bf16 %v2565, %v2564
      %v2605 = vpack.c.bf16 %v2567, %v2566
      %v2606 = vpack.c.bf16 %v2569, %v2568
      %v2607 = vpack.c.bf16 %v2571, %v2570
      %v2608 = vpack.c.bf16 %v2573, %v2572
      %v2609 = vpack.c.bf16 %v2575, %v2574
      %v2610 = vpack.c.bf16 %v2577, %v2576
      %v2611 = vpack.c.bf16 %v2579, %v2578
      %v2612 = vpack.c.bf16 %v2581, %v2580
      %v2613 = vpack.c.bf16 %v2583, %v2582
      %v2614 = vpack.c.bf16 %v2585, %v2584
      %v2615 = vpack.c.bf16 %v2587, %v2586
      %v2616 = vpack.c.bf16 %v2589, %v2588
      %v2618 = vlaneseq
      %v2619 = vshrl.u32 %v2618, 7
      %v2620 = vsub.s32 0, %v2619
      %v2621 = vrot.slane %v2600, %v2620
      %v2631 = vunpack.c.l.b16 %v2591
      %v2632 = vunpack.c.l.b16 %v2592
      %v2633 = vunpack.c.l.b16 %v2593
      %v2634 = vunpack.c.l.b16 %v2594
      %v2635 = vunpack.c.l.b16 %v2595
      %v2636 = vunpack.c.l.b16 %v2596
      %v2637 = vunpack.c.l.b16 %v2597
      %v2638 = vunpack.c.l.b16 %v2598
      %v2639 = vpack.c.b16 %v2632, %v2631
      %v2640 = vpack.c.b16 %v2634, %v2633
      %v2641 = vpack.c.b16 %v2636, %v2635
      %v2642 = vpack.c.b16 %v2638, %v2637
      %v2648 = vsel %vm262, %v2601, 0
      %v2651 = vsel %vm262, %v2602, 0
      %v2654 = vsel %vm262, %v2603, 0
      %v2657 = vsel %vm262, %v2604, 0
      %v2660 = vsel %vm262, %v2605, 0
      %v2663 = vsel %vm262, %v2606, 0
      %v2666 = vsel %vm262, %v2607, 0
      %v2669 = vsel %vm262, %v2608, 0
      %v2672 = vsel %vm262, %v2609, 0
      %v2675 = vsel %vm262, %v2610, 0
      %v2678 = vsel %vm262, %v2611, 0
      %v2681 = vsel %vm262, %v2612, 0
      %v2684 = vsel %vm262, %v2613, 0
      %v2687 = vsel %vm262, %v2614, 0
      %v2690 = vsel %vm262, %v2615, 0
      %v2693 = vsel %vm262, %v2616, 0
      %2695 = vmatprep.subr.bf16.mxu0 0
      %2696 = vmatpush1.bf16.msra.mxu0 %v2639
      %2697 = vmatprep.subr.bf16.mxu0 0
      %2698 = vmatpush1.bf16.msra.mxu0 %v2640
      %2699 = vmatprep.subr.bf16.mxu0 0
      %2700 = vmatpush1.bf16.msra.mxu0 %v2641
      %2701 = vmatprep.subr.bf16.mxu0 0
      %2702 = vmatpush1.bf16.msra.mxu0 %v2642
      %2703 = vmatprep.subr.bf16.mxu0 0
      %2704 = vmatpush1.bf16.msra.mxu0 0
      %2705 = vmatprep.subr.bf16.mxu0 0
      %2706 = vmatpush1.bf16.msra.mxu0 0
      %2707 = vmatprep.subr.bf16.mxu0 0
      %2708 = vmatpush1.bf16.msra.mxu0 0
      %2709 = vmatprep.subr.bf16.mxu0 0
      %2710 = vmatpush1.bf16.msra.mxu0 0
      %2711 = vmatprep.subr.bf16.mxu0 0
      %2712 = vmatpush1.bf16.msra.mxu0 0
      %2713 = vmatprep.subr.bf16.mxu0 0
      %2714 = vmatpush1.bf16.msra.mxu0 0
      %2715 = vmatprep.subr.bf16.mxu0 0
      %2716 = vmatpush1.bf16.msra.mxu0 0
      %2717 = vmatprep.subr.bf16.mxu0 0
      %2718 = vmatpush1.bf16.msra.mxu0 0
      %2719 = vmatprep.subr.bf16.mxu0 0
      %2720 = vmatpush1.bf16.msra.mxu0 0
      %2721 = vmatprep.subr.bf16.mxu0 0
      %2722 = vmatpush1.bf16.msra.mxu0 0
      %2723 = vmatprep.subr.bf16.mxu0 0
      %2724 = vmatpush1.bf16.msra.mxu0 0
      %2725 = vmatprep.subr.bf16.mxu0 0
      %2726 = vmatpush1.bf16.msra.mxu0 0
      %2727 = vmatprep.mubr.bf16.mxu0 0
      %2728 = vmatmul.mubr.bf16.gmra.mrb[0].mxu0 %v2648
      %v2729 = vpop.f32.mrb[0].mxu0
      %v2730 = vadd.f32 %v2621, %v2729
      %v2731 = vpop.f32.mrb[0].mxu0
      %v2732 = vpop.f32.mrb[0].mxu0
      %v2733 = vadd.f32 %v2621, %v2732
      %v2734 = vpop.f32.mrb[0].mxu0
      %2735 = vmatprep.mubr.bf16.mxu0 0
      %2736 = vmatmul.mubr.bf16.gmra.mrb[0].mxu0 %v2651
      %v2737 = vpop.f32.mrb[0].mxu0
      %v2738 = vadd.f32 %v2621, %v2737
      %v2739 = vpop.f32.mrb[0].mxu0
      %v2740 = vpop.f32.mrb[0].mxu0
      %v2741 = vadd.f32 %v2621, %v2740
      %v2742 = vpop.f32.mrb[0].mxu0
      %2743 = vmatprep.mubr.bf16.mxu0 0
      %2744 = vmatmul.mubr.bf16.gmra.mrb[0].mxu0 %v2654
      %v2745 = vpop.f32.mrb[0].mxu0
      %v2746 = vadd.f32 %v2621, %v2745
      %v2747 = vpop.f32.mrb[0].mxu0
      %v2748 = vpop.f32.mrb[0].mxu0
      %v2749 = vadd.f32 %v2621, %v2748
      %v2750 = vpop.f32.mrb[0].mxu0
      %2751 = vmatprep.mubr.bf16.mxu0 0
      %2752 = vmatmul.mubr.bf16.gmra.mrb[0].mxu0 %v2657
      %v2753 = vpop.f32.mrb[0].mxu0
      %v2754 = vadd.f32 %v2621, %v2753
      %v2755 = vpop.f32.mrb[0].mxu0
      %v2756 = vpop.f32.mrb[0].mxu0
      %v2757 = vadd.f32 %v2621, %v2756
      %v2758 = vpop.f32.mrb[0].mxu0
      %2759 = vmatprep.mubr.bf16.mxu0 0
      %2760 = vmatmul.mubr.bf16.gmra.mrb[0].mxu0 %v2660
      %v2761 = vpop.f32.mrb[0].mxu0
      %v2762 = vadd.f32 %v2621, %v2761
      %v2763 = vpop.f32.mrb[0].mxu0
      %v2764 = vpop.f32.mrb[0].mxu0
      %v2765 = vadd.f32 %v2621, %v2764
      %v2766 = vpop.f32.mrb[0].mxu0
      %2767 = vmatprep.mubr.bf16.mxu0 0
      %2768 = vmatmul.mubr.bf16.gmra.mrb[0].mxu0 %v2663
      %v2769 = vpop.f32.mrb[0].mxu0
      %v2770 = vadd.f32 %v2621, %v2769
      %v2771 = vpop.f32.mrb[0].mxu0
      %v2772 = vpop.f32.mrb[0].mxu0
      %v2773 = vadd.f32 %v2621, %v2772
      %v2774 = vpop.f32.mrb[0].mxu0
      %2775 = vmatprep.mubr.bf16.mxu0 0
      %2776 = vmatmul.mubr.bf16.gmra.mrb[0].mxu0 %v2666
      %v2777 = vpop.f32.mrb[0].mxu0
      %v2778 = vadd.f32 %v2621, %v2777
      %v2779 = vpop.f32.mrb[0].mxu0
      %v2780 = vpop.f32.mrb[0].mxu0
      %v2781 = vadd.f32 %v2621, %v2780
      %v2782 = vpop.f32.mrb[0].mxu0
      %2783 = vmatprep.mubr.bf16.mxu0 0
      %2784 = vmatmul.mubr.bf16.gmra.mrb[0].mxu0 %v2669
      %v2785 = vpop.f32.mrb[0].mxu0
      %v2786 = vadd.f32 %v2621, %v2785
      %v2787 = vpop.f32.mrb[0].mxu0
      %v2788 = vpop.f32.mrb[0].mxu0
      %v2789 = vadd.f32 %v2621, %v2788
      %v2790 = vpop.f32.mrb[0].mxu0
      %2791 = vmatprep.mubr.bf16.mxu0 0
      %2792 = vmatmul.mubr.bf16.gmra.mrb[0].mxu0 %v2672
      %v2793 = vpop.f32.mrb[0].mxu0
      %v2794 = vadd.f32 %v2621, %v2793
      %v2795 = vpop.f32.mrb[0].mxu0
      %v2796 = vpop.f32.mrb[0].mxu0
      %v2797 = vadd.f32 %v2621, %v2796
      %v2798 = vpop.f32.mrb[0].mxu0
      %2799 = vmatprep.mubr.bf16.mxu0 0
      %2800 = vmatmul.mubr.bf16.gmra.mrb[0].mxu0 %v2675
      %v2801 = vpop.f32.mrb[0].mxu0
      %v2802 = vadd.f32 %v2621, %v2801
      %v2803 = vpop.f32.mrb[0].mxu0
      %v2804 = vpop.f32.mrb[0].mxu0
      %v2805 = vadd.f32 %v2621, %v2804
      %v2806 = vpop.f32.mrb[0].mxu0
      %2807 = vmatprep.mubr.bf16.mxu0 0
      %2808 = vmatmul.mubr.bf16.gmra.mrb[0].mxu0 %v2678
      %v2809 = vpop.f32.mrb[0].mxu0
      %v2810 = vadd.f32 %v2621, %v2809
      %v2811 = vpop.f32.mrb[0].mxu0
      %v2812 = vpop.f32.mrb[0].mxu0
      %v2813 = vadd.f32 %v2621, %v2812
      %v2814 = vpop.f32.mrb[0].mxu0
      %2815 = vmatprep.mubr.bf16.mxu0 0
      %2816 = vmatmul.mubr.bf16.gmra.mrb[0].mxu0 %v2681
      %v2817 = vpop.f32.mrb[0].mxu0
      %v2818 = vadd.f32 %v2621, %v2817
      %v2819 = vpop.f32.mrb[0].mxu0
      %v2820 = vpop.f32.mrb[0].mxu0
      %v2821 = vadd.f32 %v2621, %v2820
      %v2822 = vpop.f32.mrb[0].mxu0
      %2823 = vmatprep.mubr.bf16.mxu0 0
      %2824 = vmatmul.mubr.bf16.gmra.mrb[0].mxu0 %v2684
      %v2825 = vpop.f32.mrb[0].mxu0
      %v2826 = vadd.f32 %v2621, %v2825
      %v2827 = vpop.f32.mrb[0].mxu0
      %v2828 = vpop.f32.mrb[0].mxu0
      %v2829 = vadd.f32 %v2621, %v2828
      %v2830 = vpop.f32.mrb[0].mxu0
      %2831 = vmatprep.mubr.bf16.mxu0 0
      %2832 = vmatmul.mubr.bf16.gmra.mrb[0].mxu0 %v2687
      %v2833 = vpop.f32.mrb[0].mxu0
      %v2834 = vadd.f32 %v2621, %v2833
      %v2835 = vpop.f32.mrb[0].mxu0
      %v2836 = vpop.f32.mrb[0].mxu0
      %v2837 = vadd.f32 %v2621, %v2836
      %v2838 = vpop.f32.mrb[0].mxu0
      %2839 = vmatprep.mubr.bf16.mxu0 0
      %2840 = vmatmul.mubr.bf16.gmra.mrb[0].mxu0 %v2690
      %v2841 = vpop.f32.mrb[0].mxu0
      %v2842 = vadd.f32 %v2621, %v2841
      %v2843 = vpop.f32.mrb[0].mxu0
      %v2844 = vpop.f32.mrb[0].mxu0
      %v2845 = vadd.f32 %v2621, %v2844
      %v2846 = vpop.f32.mrb[0].mxu0
      %2847 = vmatprep.mubr.bf16.mxu0 0
      %2848 = vmatmul.mubr.bf16.gmra.mrb[0].mxu0 %v2693
      %v2849 = vpop.f32.mrb[0].mxu0
      %v2850 = vadd.f32 %v2621, %v2849
      %v2851 = vpop.f32.mrb[0].mxu0
      %v2852 = vpop.f32.mrb[0].mxu0
      %v2853 = vadd.f32 %v2621, %v2852
      %v2854 = vpop.f32.mrb[0].mxu0
      %2855 = vdwg.mxu0
      %vm2856 = vcmask 130048
      %2857 = vst.msk [vmem:[%s172] sm:$0xff] %vm2856, %v2730
      %2858 = vst.msk [vmem:[%s172 + $0x8] sm:$0xff] %vm2856, %v2733
      %2859 = vst.msk [vmem:[%s172 + $0x10] sm:$0xff] %vm2856, %v2738
      %2860 = vst.msk [vmem:[%s172 + $0x18] sm:$0xff] %vm2856, %v2741
      %2861 = vst.msk [vmem:[%s172 + $0x20] sm:$0xff] %vm2856, %v2746
      %2862 = vst.msk [vmem:[%s172 + $0x28] sm:$0xff] %vm2856, %v2749
      %2863 = vst.msk [vmem:[%s172 + $0x30] sm:$0xff] %vm2856, %v2754
      %2864 = vst.msk [vmem:[%s172 + $0x38] sm:$0xff] %vm2856, %v2757
      %2865 = vst.msk [vmem:[%s172 + $0x40] sm:$0xff] %vm2856, %v2762
      %2866 = vst.msk [vmem:[%s172 + $0x48] sm:$0xff] %vm2856, %v2765
      %2867 = vst.msk [vmem:[%s172 + $0x50] sm:$0xff] %vm2856, %v2770
      %2868 = vst.msk [vmem:[%s172 + $0x58] sm:$0xff] %vm2856, %v2773
      %2869 = vst.msk [vmem:[%s172 + $0x60] sm:$0xff] %vm2856, %v2778
      %2870 = vst.msk [vmem:[%s172 + $0x68] sm:$0xff] %vm2856, %v2781
      %2871 = vst.msk [vmem:[%s172 + $0x70] sm:$0xff] %vm2856, %v2786
      %2872 = vst.msk [vmem:[%s172 + $0x78] sm:$0xff] %vm2856, %v2789
      %2873 = vst.msk [vmem:[%s172 + $0x80] sm:$0xff] %vm2856, %v2794
      %2874 = vst.msk [vmem:[%s172 + $0x88] sm:$0xff] %vm2856, %v2797
      %2875 = vst.msk [vmem:[%s172 + $0x90] sm:$0xff] %vm2856, %v2802
      %2876 = vst.msk [vmem:[%s172 + $0x98] sm:$0xff] %vm2856, %v2805
      %2877 = vst.msk [vmem:[%s172 + $0xa0] sm:$0xff] %vm2856, %v2810
      %2878 = vst.msk [vmem:[%s172 + $0xa8] sm:$0xff] %vm2856, %v2813
      %2879 = vst.msk [vmem:[%s172 + $0xb0] sm:$0xff] %vm2856, %v2818
      %2880 = vst.msk [vmem:[%s172 + $0xb8] sm:$0xff] %vm2856, %v2821
      %2881 = vst.msk [vmem:[%s172 + $0xc0] sm:$0xff] %vm2856, %v2826
      %2882 = vst.msk [vmem:[%s172 + $0xc8] sm:$0xff] %vm2856, %v2829
      %2883 = vst.msk [vmem:[%s172 + $0xd0] sm:$0xff] %vm2856, %v2834
      %2884 = vst.msk [vmem:[%s172 + $0xd8] sm:$0xff] %vm2856, %v2837
      %2885 = vst.msk [vmem:[%s172 + $0xe0] sm:$0xff] %vm2856, %v2842
      %2886 = vst.msk [vmem:[%s172 + $0xe8] sm:$0xff] %vm2856, %v2845
      %2887 = vst.msk [vmem:[%s172 + $0xf0] sm:$0xff] %vm2856, %v2850
      %2888 = vst.msk [vmem:[%s172 + $0xf8] sm:$0xff] %vm2856, %v2853
      %s2889 = smul.u32 32, %s14
      %p2890 = scmp.lt.s32.totalorder %s2889, 63
      %s2891 = scalar_select %p2890, %s2889, 63
      %s2892 = smul.addr %s2891, 8
      %s2893 = scalar_lea.vmem %s3, %s2892
      // Predicated region
      $region33: #{tpu_custom_call.1} parent=31 // pred_check
        %p2894 = pneg %p100
      $region34: #{tpu_custom_call.1} parent=31 // pred_check_branch
        %2896 = sbr.rel (%p2894) target = $region36
      $region35: #{tpu_custom_call.1} parent=31 // pred_region
        %s2897 = smul.u32 32, %s14
      $region36: #{tpu_custom_call.1} parent=31 // pred_fallthru
        _
    $region32: #{tpu_custom_call.1} parent=5 // pred_fallthru
      _
    %p2898 = scmp.le.s32.totalorder 2, %s9
    // Predicated region
    $region37: #{tpu_custom_call.1} parent=5 // pred_check
      %p2899 = pneg %p2898
    $region38: #{tpu_custom_call.1} parent=5 // pred_check_branch
      %2901 = sbr.rel (%p2899) target = $region40
    $region39: #{tpu_custom_call.1} parent=5 // pred_region
      %s2902 = ssub.s32 %s9, 2
      // Predicated region
      $region41: #{tpu_custom_call.1} parent=39 // pred_check
        %p2903 = pneg %p106
      $region42: #{tpu_custom_call.1} parent=39 // pred_check_branch
        %2905 = sbr.rel (%p2903) target = $region44
      $region43: #{tpu_custom_call.1} parent=39 // pred_region
        %s2906 = smul.u32 32, %s15
        %p2907 = scmp.lt.s32.totalorder %s2906, 63
        %s2908 = scalar_select %p2907, %s2906, 63
        %s2909 = smul.addr %s2908, 8
        %s2910 = scalar_lea.vmem %s3, %s2909
      $region44: #{tpu_custom_call.1} parent=39 // pred_fallthru
        _
    $region40: #{tpu_custom_call.1} parent=5 // pred_fallthru
      _
  $region6: #{tpu_custom_call.1} parent=0 // loop_footer
    %s13 = sadd.s32 1, %s9
  $region7: #{tpu_custom_call.1} parent=0 // loop_footer_branch
    %8 = sbr.rel target = $region3
  $region8: #{tpu_custom_call.1} parent=0 // loop_exit
    _

</llo_original>
